<compile_context>
chip_gen: v7x
topology: tpu7x:2x2x1
jax: 0.10.0
libtpu: 0.0.40
codegen_flags: <defaults>
</compile_context>

<pallas_src>
import functools

import jax
import jax.numpy as jnp
import numpy as np
from jax.experimental import pallas as pl
from jax.experimental.pallas import tpu as pltpu

PAD_ID = 1


def _round_up(x, m):
    return ((x + m - 1) // m) * m


# ----------------------------------------------------------------------------
# Kernel 1: fused embedding-gather + masked-mean-pool + dense + tanh pooler.
#   ids   : (N, 1, S) int32 token ids (N = 3*bs, padded), tiled (tn, 1, ts)
#   table : (V, H)    bf16  embedding table  (full block, VMEM-resident)
#   cnt   : (N, 1)    f32   non-pad token counts (computed in wrapper)
#   W     : (H, H)    f32   pooler dense weight (resident)
#   b     : (1, H)    f32   pooler dense bias   (resident)
#   out   : (N, H)    f32   tanh(masked_mean_pool(table[ids]) @ W + b)
# Scratch: acc (tn, H) f32 masked-sum accumulator.
# Grid axis 0 (N tiles) "parallel" (megacore), axis 1 (S tiles) "arbitrary".
# ----------------------------------------------------------------------------
def pooler_kernel(ids_ref, table_ref, cnt_ref, w_ref, b_ref, out_ref, acc_ref):
    s = pl.program_id(1)
    tn = ids_ref.shape[0]
    ts = ids_ref.shape[2]
    vocab = table_ref.shape[0]

    @pl.when(s == 0)
    def _():
        acc_ref[...] = jnp.zeros_like(acc_ref)

    # Per-row masked token histogram over the vocab:
    #   hist[n, v] = #{ t : ids[n, t] == v } with the pad column (v == PAD_ID)
    # zeroed -> the attention mask (ids != 1) falls out for free.
    # ids tile is (tn, 1, ts): broadcasting along the (major) vocab axis needs
    # no lane/sublane relayout; the reduce over ts is a plain lane reduction.
    ids = ids_ref[...]                                          # (tn, 1, ts)
    v_iota = jax.lax.broadcasted_iota(jnp.int32, (tn, vocab, ts), 1)
    hit = jnp.logical_and(ids == v_iota, v_iota != PAD_ID)      # (tn, V, ts)
    hist = jnp.sum(jnp.where(hit, 1.0, 0.0), axis=2)            # (tn, V) f32

    # Masked sum of embeddings = hist @ table: one MXU matmul per step and a
    # single full unmasked (tn, H) accumulate (no per-row RMW stores).
    acc_ref[...] += jnp.dot(hist.astype(jnp.bfloat16), table_ref[...],
                            preferred_element_type=jnp.float32)

    @pl.when(s == pl.num_programs(1) - 1)
    def _():
        pooled = acc_ref[...] / jnp.maximum(cnt_ref[...], 1.0)  # (tn, H)
        # NOTE: f32 matmul at MXU default precision; at much larger H align
        # or raise the precision if tighter tolerances are required.
        h = jnp.dot(pooled, w_ref[...],
                    preferred_element_type=jnp.float32) + b_ref[...]
        out_ref[...] = jnp.tanh(h)


def encoder_pooler_fused(ids, table, W, b, *, tn=64, ts=None,
                         vmem_limit_bytes=48 * 1024 * 1024):
    N, S = ids.shape
    V, H = table.shape

    # ts: full S, or a multiple of 128 that divides S (lane rule).
    if ts is None:
        ts = S
    if S % ts != 0 or (ts != S and ts % 128 != 0):
        ts = S

    # tn: multiple of 8 (sublane); pad N up to a multiple of tn with pad-id
    # rows instead of falling back to tn=N.  (On v7x prefer tn such that the
    # parallel grid extent N//tn is even so both TensorCores stay busy.)
    tn = max(8, min(int(tn), _round_up(N, 8)))
    tn -= tn % 8
    n_pad = _round_up(N, tn)
    if n_pad != N:
        ids = jnp.pad(ids, ((0, n_pad - N), (0, 0)), constant_values=PAD_ID)

    # Non-pad token counts on the tiny (N, S) ids array (wrapper-side).
    cnt = jnp.sum((ids != PAD_ID).astype(jnp.float32), axis=1, keepdims=True)
    ids3 = ids.reshape(n_pad, 1, S)

    grid = (n_pad // tn, S // ts)
    out = pl.pallas_call(
        pooler_kernel,
        out_shape=jax.ShapeDtypeStruct((n_pad, H), jnp.float32),
        grid=grid,
        in_specs=[
            pl.BlockSpec((tn, 1, ts), lambda n, s: (n, 0, s)),   # ids tile
            pl.BlockSpec((V, H), lambda n, s: (0, 0)),           # table (resident)
            pl.BlockSpec((tn, 1), lambda n, s: (n, 0)),          # token counts
            pl.BlockSpec((H, H), lambda n, s: (0, 0)),           # W (resident)
            pl.BlockSpec((1, H), lambda n, s: (0, 0)),           # b (resident)
        ],
        out_specs=pl.BlockSpec((tn, H), lambda n, s: (n, 0)),
        scratch_shapes=[pltpu.VMEM((tn, H), jnp.float32)],        # masked-sum acc
        compiler_params=pltpu.CompilerParams(
            dimension_semantics=("parallel", "arbitrary"),
            vmem_limit_bytes=vmem_limit_bytes,
        ),
    )(ids3, table, cnt, W, b)
    return out[:N]


# ----------------------------------------------------------------------------
# Kernel 2: clone-detection contrastive head (single tiny launch).
#   pooled  : (3*bs, H) f32  -- o0/o1/o2 sliced statically inside the kernel
#   lab_col : (bs, 1)   i32, lab_row : (1, bs) i32
#   loss    : (1, 1)    f32
# Equivalent to:
#   prob_1 = (o0*o1).sum(-1); prob_2 = (o0*o2).sum(-1)
#   temp = cat(o0, o1); prob_3 = o0 @ temp.T masked where labels match (-1e9)
#   prob = softmax(cat(prob_1, prob_2, prob_3), -1)
#   loss = -mean(log(prob[:, 0] + 1e-10))
# The concat is avoided by splitting prob_3 into o0@o0.T and o0@o1.T (the
# temp_labels mask is identical for both halves); blockwise softmax with a
# shared row max -> numerically identical.
# ----------------------------------------------------------------------------
def clone_head_kernel(bs, pooled_ref, lab_col_ref, lab_row_ref, loss_ref):
    a = pooled_ref[pl.ds(0, bs), :]
    b = pooled_ref[pl.ds(bs, bs), :]
    c = pooled_ref[pl.ds(2 * bs, bs), :]

    prob_1 = jnp.sum(a * b, axis=-1, keepdims=True)      # (bs, 1)
    prob_2 = jnp.sum(a * c, axis=-1, keepdims=True)      # (bs, 1)

    dn = (((1,), (1,)), ((), ()))                        # contract hidden dim
    s_aa = jax.lax.dot_general(a, a, dn, preferred_element_type=jnp.float32)
    s_ab = jax.lax.dot_general(a, b, dn, preferred_element_type=jnp.float32)

    m = (lab_col_ref[...] == lab_row_ref[...]).astype(jnp.float32)  # (bs, bs)
    s_aa = s_aa * (1.0 - m) - 1e9 * m
    s_ab = s_ab * (1.0 - m) - 1e9 * m

    row_max = jnp.maximum(
        jnp.maximum(prob_1, prob_2),
        jnp.maximum(jnp.max(s_aa, axis=-1, keepdims=True),
                    jnp.max(s_ab, axis=-1, keepdims=True)))

    e1 = jnp.exp(prob_1 - row_max)
    e2 = jnp.exp(prob_2 - row_max)
    eaa = jnp.sum(jnp.exp(s_aa - row_max), axis=-1, keepdims=True)
    eab = jnp.sum(jnp.exp(s_ab - row_max), axis=-1, keepdims=True)
    denom = e1 + e2 + eaa + eab

    p0 = e1 / denom                                       # softmax(...)[:, 0]
    neg_log = -jnp.log(p0 + 1e-10)                        # (bs, 1)
    loss_ref[...] = jnp.sum(neg_log, axis=0, keepdims=True) / float(bs)


def clone_head(pooled, labels, bs):
    lab = labels.astype(jnp.int32)
    lab_col = lab.reshape(bs, 1)
    lab_row = lab.reshape(1, bs)
    kernel = functools.partial(clone_head_kernel, bs)
    loss = pl.pallas_call(
        kernel,
        out_shape=jax.ShapeDtypeStruct((1, 1), jnp.float32),
        in_specs=[pl.BlockSpec(memory_space=pltpu.MemorySpace.VMEM)] * 3,
        out_specs=pl.BlockSpec(memory_space=pltpu.MemorySpace.VMEM),
    )(pooled, lab_col, lab_row)
    return loss[0, 0]


# ----------------------------------------------------------------------------
# Full forward (glue in plain JAX: concat of inputs only -- the embedding
# gather is fused into the pooler kernel, no (3bs, S, H) tensor is created).
# ----------------------------------------------------------------------------
def clone_detect_forward(params, input_ids, p_input_ids, n_input_ids, labels,
                         *, tn=64, ts=None):
    bs = input_ids.shape[0]
    ids = jnp.concatenate([input_ids, p_input_ids, n_input_ids], axis=0)  # (3bs, S)
    pooled = encoder_pooler_fused(ids, params["emb_table"], params["W"],
                                  params["b"], tn=tn, ts=ts)              # (3bs, H)
    loss = clone_head(pooled, labels, bs)
    return loss, pooled[:bs]


# Pure-JAX reference (mirrors the PyTorch forward literally, same stand-in encoder)
def reference_forward(params, input_ids, p_input_ids, n_input_ids, labels):
    bs = input_ids.shape[0]
    ids = jnp.concatenate([input_ids, p_input_ids, n_input_ids], axis=0)
    attn = (ids != PAD_ID).astype(jnp.float32)
    emb = jnp.take(params["emb_table"], ids, axis=0).astype(jnp.float32)
    summed = jnp.sum(emb * attn[:, :, None], axis=1)
    cnt = jnp.maximum(jnp.sum(attn, axis=1, keepdims=True), 1.0)
    hp = jnp.dot(summed / cnt, params["W"]) + params["b"]
    pooled = jnp.tanh(hp)
    o0, o1, o2 = pooled[:bs], pooled[bs:2 * bs], pooled[2 * bs:]
    prob_1 = jnp.sum(o0 * o1, -1)
    prob_2 = jnp.sum(o0 * o2, -1)
    temp = jnp.concatenate([o0, o1], axis=0)
    temp_labels = jnp.concatenate([labels, labels], axis=0)
    prob_3 = jnp.dot(o0, temp.T)
    m = (labels[:, None] == temp_labels[None, :]).astype(jnp.float32)
    prob_3 = prob_3 * (1.0 - m) - 1e9 * m
    logits = jnp.concatenate([prob_1[:, None], prob_2[:, None], prob_3], axis=-1)
    prob = jax.nn.softmax(logits, axis=-1)
    loss = -jnp.mean(jnp.log(prob[:, 0] + 1e-10))
    return loss, o0


if __name__ == "__main__":
    # Lane/sublane-friendly small shapes: H=128 (full lane), bs multiple of 8.
    bs, seq, hidden, vocab = 8, 256, 128, 64

    key = jax.random.PRNGKey(0)
    k1, k2, k3, k4, k5, k6, k7 = jax.random.split(key, 7)

    params = {
        # emb_table stored bf16: only table + int32 ids hit HBM (gather fused).
        "emb_table": (0.5 * jax.random.normal(k1, (vocab, hidden),
                                              jnp.float32)).astype(jnp.bfloat16),
        "W": 0.2 * jax.random.normal(k2, (hidden, hidden), jnp.float32),
        "b": 0.05 * jax.random.normal(k7, (1, hidden), jnp.float32),
    }

    input_ids = jax.random.randint(k3, (bs, seq), 0, vocab, dtype=jnp.int32)
    p_input_ids = jax.random.randint(k4, (bs, seq), 0, vocab, dtype=jnp.int32)
    n_input_ids = jax.random.randint(k5, (bs, seq), 0, vocab, dtype=jnp.int32)
    # inject pad tokens (pad id = 1) so the attention mask is exercised
    input_ids = input_ids.at[:, -40:].set(PAD_ID)
    p_input_ids = p_input_ids.at[:, -13:].set(PAD_ID)
    labels = jax.random.randint(k6, (bs,), 0, 2, dtype=jnp.int32)

    # Small demo explicitly requests tn=8, ts=128 so the (3, 2) grid exercises
    # multi-tile index maps and the S-axis accumulator; production defaults
    # (tn=64, ts=S) grow the tiles per the perf review.
    loss, out0 = clone_detect_forward(params, input_ids, p_input_ids,
                                      n_input_ids, labels, tn=8, ts=128)
    loss = jax.block_until_ready(loss)
    out0 = jax.block_until_ready(out0)

    ref_loss, ref_out0 = reference_forward(params, input_ids, p_input_ids,
                                           n_input_ids, labels)
    np.testing.assert_allclose(np.asarray(loss), np.asarray(ref_loss),
                               rtol=1e-4, atol=1e-5)
    np.testing.assert_allclose(np.asarray(out0), np.asarray(ref_out0),
                               rtol=1e-4, atol=1e-5)

    print("KERNEL_OK")
</pallas_src>

<mosaic_0001>
module attributes {stable_mosaic.version = 11 : i64} {
  func.func @pooler_kernel(%arg0: i32, %arg1: i32, %arg2: memref<8x1x128xi32, #tpu.memory_space<vmem>>, %arg3: memref<64x128xbf16, #tpu.memory_space<vmem>>, %arg4: memref<8x1xf32, #tpu.memory_space<vmem>>, %arg5: memref<128x128xf32, #tpu.memory_space<vmem>>, %arg6: memref<1x128xf32, #tpu.memory_space<vmem>>, %arg7: memref<8x128xf32, #tpu.memory_space<vmem>>, %arg8: memref<8x128xf32, #tpu.memory_space<vmem>>) attributes {dimension_semantics = [#tpu.dimension_semantics<parallel>, #tpu.dimension_semantics<arbitrary>], iteration_bounds = array<i64: 3, 2>, scalar_prefetch = 0 : i64, scratch_operands = 1 : i64, tpu.core_type = #tpu.core_type<tc>, window_params = [{transform_indices = @transform_0, window_bounds = array<i64: 8, 1, 128>}, {pipeline_mode = #tpu.pipeline_mode<synchronous>, transform_indices = @transform_1, window_bounds = array<i64: 64, 128>}, {transform_indices = @transform_2, window_bounds = array<i64: 8, 1>}, {pipeline_mode = #tpu.pipeline_mode<synchronous>, transform_indices = @transform_3, window_bounds = array<i64: 128, 128>}, {pipeline_mode = #tpu.pipeline_mode<synchronous>, transform_indices = @transform_4, window_bounds = array<i64: 1, 128>}, {transform_indices = @transform_5, window_bounds = array<i64: 8, 128>}]} {
    %c0_i32 = arith.constant 0 : i32
    %0 = arith.cmpi eq, %arg1, %c0_i32 : i32
    %1 = arith.extui %0 : i1 to i32
    %c0_i32_0 = arith.constant 0 : i32
    %2 = arith.cmpi ne, %1, %c0_i32_0 : i32
    scf.if %2 {
      %cst_14 = arith.constant 0.000000e+00 : f32
      %23 = vector.broadcast %cst_14 : f32 to vector<8x128xf32>
      %c0_15 = arith.constant 0 : index
      %c0_16 = arith.constant 0 : index
      %24 = vector.load %arg8[%c0_15, %c0_16] : memref<8x128xf32, #tpu.memory_space<vmem>>, vector<8x128xf32>
      tpu.vector_store %arg8[%c0_15, %c0_16], %23 {strides = array<i32>} : memref<8x128xf32, #tpu.memory_space<vmem>>, vector<8x128xf32>,
    } else {
    }
    %c0 = arith.constant 0 : index
    %c0_1 = arith.constant 0 : index
    %c0_2 = arith.constant 0 : index
    %3 = vector.load %arg2[%c0, %c0_1, %c0_2] : memref<8x1x128xi32, #tpu.memory_space<vmem>>, vector<8x1x128xi32>
    %4 = tpu.iota {dimensions = array<i32: 1>} : vector<8x64x128xi32>
    %5 = vector.broadcast %3 : vector<8x1x128xi32> to vector<8x64x128xi32>
    %6 = arith.cmpi eq, %5, %4 : vector<8x64x128xi32>
    %c1_i32 = arith.constant 1 : i32
    %7 = vector.broadcast %c1_i32 : i32 to vector<8x64x128xi32>
    %8 = arith.cmpi ne, %4, %7 : vector<8x64x128xi32>
    %9 = arith.andi %6, %8 : vector<8x64x128xi1>
    %cst = arith.constant 1.000000e+00 : f32
    %cst_3 = arith.constant 0.000000e+00 : f32
    %10 = vector.broadcast %cst : f32 to vector<8x64x128xf32>
    %11 = vector.broadcast %cst_3 : f32 to vector<8x64x128xf32>
    %12 = arith.select %9, %10, %11 : vector<8x64x128xi1>, vector<8x64x128xf32>
    %cst_4 = arith.constant dense<0.000000e+00> : vector<8x64xf32>
    %13 = vector.multi_reduction <add>, %12, %cst_4 [2] : vector<8x64x128xf32> to vector<8x64xf32>
    %c0_5 = arith.constant 0 : index
    %c0_6 = arith.constant 0 : index
    %14 = vector.load %arg8[%c0_5, %c0_6] : memref<8x128xf32, #tpu.memory_space<vmem>>, vector<8x128xf32>
    %15 = arith.truncf %13 : vector<8x64xf32> to vector<8x64xbf16>
    %c0_7 = arith.constant 0 : index
    %c0_8 = arith.constant 0 : index
    %16 = vector.load %arg3[%c0_7, %c0_8] : memref<64x128xbf16, #tpu.memory_space<vmem>>, vector<64x128xbf16>
    %cst_9 = arith.constant dense<0.000000e+00> : vector<8x128xf32>
    %17 = tpu.matmul %15, %16, %cst_9 {dimension_numbers = #tpu.dot_dimension_numbers<[1], [0], [0], [1], [0, 0, 1, 1], [], []>} : vector<8x64xbf16>, vector<64x128xbf16>, vector<8x128xf32> -> vector<8x128xf32>
    %18 = arith.addf %14, %17 : vector<8x128xf32>
    %c0_10 = arith.constant 0 : index
    %c0_11 = arith.constant 0 : index
    %19 = vector.load %arg8[%c0_10, %c0_11] : memref<8x128xf32, #tpu.memory_space<vmem>>, vector<8x128xf32>
    tpu.vector_store %arg8[%c0_10, %c0_11], %18 {strides = array<i32>} : memref<8x128xf32, #tpu.memory_space<vmem>>, vector<8x128xf32>,
    %c1_i32_12 = arith.constant 1 : i32
    %20 = arith.cmpi eq, %arg1, %c1_i32_12 : i32
    %21 = arith.extui %20 : i1 to i32
    %c0_i32_13 = arith.constant 0 : i32
    %22 = arith.cmpi ne, %21, %c0_i32_13 : i32
    scf.if %22 {
      %c0_14 = arith.constant 0 : index
      %c0_15 = arith.constant 0 : index
      %23 = vector.load %arg8[%c0_14, %c0_15] : memref<8x128xf32, #tpu.memory_space<vmem>>, vector<8x128xf32>
      %c0_16 = arith.constant 0 : index
      %c0_17 = arith.constant 0 : index
      %24 = vector.load %arg4[%c0_16, %c0_17] : memref<8x1xf32, #tpu.memory_space<vmem>>, vector<8x1xf32>
      %cst_18 = arith.constant 1.000000e+00 : f32
      %25 = vector.broadcast %cst_18 : f32 to vector<8x1xf32>
      %26 = arith.maximumf %24, %25 : vector<8x1xf32>
      %27 = vector.broadcast %26 : vector<8x1xf32> to vector<8x128xf32>
      %28 = arith.divf %23, %27 : vector<8x128xf32>
      %c0_19 = arith.constant 0 : index
      %c0_20 = arith.constant 0 : index
      %29 = vector.load %arg5[%c0_19, %c0_20] : memref<128x128xf32, #tpu.memory_space<vmem>>, vector<128x128xf32>
      %cst_21 = arith.constant dense<0.000000e+00> : vector<8x128xf32>
      %30 = tpu.matmul %28, %29, %cst_21 {dimension_numbers = #tpu.dot_dimension_numbers<[1], [0], [0], [1], [0, 0, 1, 1], [], []>} : vector<8x128xf32>, vector<128x128xf32>, vector<8x128xf32> -> vector<8x128xf32>
      %c0_22 = arith.constant 0 : index
      %c0_23 = arith.constant 0 : index
      %31 = vector.load %arg6[%c0_22, %c0_23] : memref<1x128xf32, #tpu.memory_space<vmem>>, vector<1x128xf32>
      %32 = vector.broadcast %31 : vector<1x128xf32> to vector<8x128xf32>
      %33 = arith.addf %30, %32 : vector<8x128xf32>
      %34 = math.tanh %33 : vector<8x128xf32>
      %c0_24 = arith.constant 0 : index
      %c0_25 = arith.constant 0 : index
      %35 = vector.load %arg7[%c0_24, %c0_25] : memref<8x128xf32, #tpu.memory_space<vmem>>, vector<8x128xf32>
      tpu.vector_store %arg7[%c0_24, %c0_25], %34 {strides = array<i32>} : memref<8x128xf32, #tpu.memory_space<vmem>>, vector<8x128xf32>,
    } else {
    }
    return
  }
  func.func @transform_0(%arg0: i32, %arg1: i32) -> (i32, i32, i32) {
    %c0_i32 = arith.constant 0 : i32
    %c0_i32_0 = arith.constant 0 : i32
    return %arg0, %c0_i32, %arg1 : i32, i32, i32
  }
  func.func @transform_1(%arg0: i32, %arg1: i32) -> (i32, i32) {
    %c0_i32 = arith.constant 0 : i32
    %c0_i32_0 = arith.constant 0 : i32
    %c0_i32_1 = arith.constant 0 : i32
    return %c0_i32, %c0_i32_0 : i32, i32
  }
  func.func @transform_2(%arg0: i32, %arg1: i32) -> (i32, i32) {
    %c0_i32 = arith.constant 0 : i32
    %c0_i32_0 = arith.constant 0 : i32
    return %arg0, %c0_i32 : i32, i32
  }
  func.func @transform_3(%arg0: i32, %arg1: i32) -> (i32, i32) {
    %c0_i32 = arith.constant 0 : i32
    %c0_i32_0 = arith.constant 0 : i32
    %c0_i32_1 = arith.constant 0 : i32
    return %c0_i32, %c0_i32_0 : i32, i32
  }
  func.func @transform_4(%arg0: i32, %arg1: i32) -> (i32, i32) {
    %c0_i32 = arith.constant 0 : i32
    %c0_i32_0 = arith.constant 0 : i32
    %c0_i32_1 = arith.constant 0 : i32
    return %c0_i32, %c0_i32_0 : i32, i32
  }
  func.func @transform_5(%arg0: i32, %arg1: i32) -> (i32, i32) {
    %c0_i32 = arith.constant 0 : i32
    %c0_i32_0 = arith.constant 0 : i32
    return %arg0, %c0_i32 : i32, i32
  }
}

</mosaic_0001>

<llo_original>
// kernel: tpu_custom_call.1
$region0: #{tpu_custom_call.1}
  #allocation0 [shape = 'u32[]', space=smem, size = 0x4, offset = 0x4, fixed_abs, tag = 'smem constant byte address 0x4 - core index']
  #allocation1 [shape = 'u32[144,128]{1,0:T(1,128)}', space=vmem, size = 0x12000, scoped, tag = 'internal scratch']
  #allocation2 [shape = 'f32[8,128]{1,0:T(8,128)}', space=vmem, size = 0x1000, scoped, tag = 'scratch operand']
  %s0 = inlined_call_operand.hbm [shape: s32[24,1,256], index: 0, kind: input, shape index: {}]
  %s1 = inlined_call_operand.hbm [shape: bf16[64,128], index: 1, kind: input, shape index: {}]
  %s2 = inlined_call_operand.vmem [shape: f32[24,1], index: 2, kind: input, shape index: {}]
  %s3 = inlined_call_operand.hbm [shape: f32[128,128], index: 3, kind: input, shape index: {}]
  %s4 = inlined_call_operand.vmem [shape: f32[1,128], index: 4, kind: input, shape index: {}]
  %s5 = inlined_call_operand.hbm [shape: f32[24,128], index: 5, kind: output, shape index: {}]
  %s6 = sld [smem:[#allocation0]]
  $region73: #{tpu_custom_call.1} parent=0
    _
  %s8 = ssub.s32 1, %s6
  %s9 = scalar_select 0, %s8, %s6
  $region1: #{tpu_custom_call.1} parent=0
    #allocation3 [shape = 'u8[8192]{0}', space=vmem, size = 0x2000, scoped, tag = 'input window, operand 0']
    #allocation4 [shape = 's32[2]{0}', space=sflag, size = 0x8, scoped, tag = 'scoped memory for tpu_custom_call.1']
    #allocation5 [shape = 's32[2]{0}', space=sflag, size = 0x8, scoped, tag = 'scoped memory for tpu_custom_call.1']
    #allocation6 [shape = 'u8[16384]{0}', space=vmem, size = 0x4000, scoped, tag = 'input window, operand 1, single buffered']
    #allocation7 [shape = 's32[1]{0}', space=sflag, size = 0x4, scoped, tag = 'scoped memory for tpu_custom_call.1']
    #allocation8 [shape = 'u8[65536]{0}', space=vmem, size = 0x10000, scoped, tag = 'input window, operand 3, single buffered']
    #allocation9 [shape = 'u8[8192]{0}', space=vmem, size = 0x2000, scoped, tag = 'output window, operand 0']
    %10 = vsyncpa [#allocation4], 0
    %s11 = scalar_lea.sflag [#allocation4], 1
    %12 = vsyncpa %s11, 0
    %13 = vsyncpa [#allocation7], 0
    %14 = vsyncpa [#allocation5], 0
    %s15 = scalar_lea.sflag [#allocation5], 1
    %16 = vsyncpa %s15, 0
    loop: start=0, step=1, limit=8
    $region2: #{tpu_custom_call.1} parent=1 // loop_pre_header
      _
    $region3: #{tpu_custom_call.1} parent=1 // loop_header
      %s18 = sphi 0, %s22
      %p19 = scmp.ge.s32.totalorder %s18, 8
      %s25 = sphi 0, %s37
      %s26 = sphi 0, %s33
      %s27 = sphi 0, %s25
      %s28 = sphi 0, %s26
      %s29 = sphi 0, %s27
      %s30 = sphi 0, %s28
      %s42 = sphi 0, %s44
      %s45 = sphi 0, %s42
      %s46 = sphi 0, %s45
      %s62 = sphi 0, %s46
      %s66 = sphi 0, %s66
      %s68 = sphi 0, %s66
      %s69 = sphi 0, %s68
      %s83 = sphi 0, %s69
      %s89 = sphi 0, %s91
      %s92 = sphi 0, %s89
      %s93 = sphi 0, %s92
      %s109 = sphi 0, %s93
      %s113 = sphi 0, %s113
      %s115 = sphi 0, %s113
      %s116 = sphi 0, %s115
      %s130 = sphi 0, %s116
      %s134 = sphi 0, %s134
      %s136 = sphi 0, %s134
      %s137 = sphi 0, %s136
      %s151 = sphi 0, %s137
      %s157 = sphi 0, %s159
      %s160 = sphi 0, %s157
      %s161 = sphi 0, %s160
      %s177 = sphi 0, %s161
    $region4: #{tpu_custom_call.1} parent=1 // loop_header_branch
      %21 = sbr.rel (%p19) target = $region8
    $region5: #{tpu_custom_call.1} parent=1 // loop_body
      %s23 = ssub.s32 %s18, 1
      %s24 = ssub.s32 %s18, 2
      %s31 = sadd.s32 1, %s26
      %p32 = scmp.ge.s32.totalorder %s31, 2
      %s33 = scalar_select %p32, 0, %s31
      %s34 = sadd.s32 1, %s25
      %s35 = scalar_select %p32, %s34, %s25
      %p36 = scmp.ge.s32.totalorder %s35, 3
      %s37 = scalar_select %p36, 0, %s35
      %s38 = ssub.s32 %s25, %s37
      %s39 = ssub.s32 %s26, %s33
      %s40 = sor.u32 %s38, %s39
      %p41 = scmp.eq.s32.totalorder %s40, 0
      %s43 = sadd.s32 %s42, 1
      %s44 = scalar_select %p41, %s42, %s43
      %p47 = pneg %p41
      %p48 = scmp.eq.s32.totalorder %s18, 5
      %p49 = por %p47, %p48
      %p50 = scmp.ne.s32.totalorder %s42, %s45
      %p51 = scmp.eq.s32.totalorder %s18, 0
      %p52 = por %p50, %p51
      %p53 = scmp.ne.s32.totalorder %s42, %s45
      %p54 = scmp.eq.s32.totalorder %s23, 5
      %p55 = por %p53, %p54
      %p56 = scmp.ne.s32.totalorder %s45, %s46
      %p57 = scmp.eq.s32.totalorder %s23, 0
      %p58 = por %p56, %p57
      %p59 = scmp.ne.s32.totalorder %s45, %s46
      %p60 = scmp.eq.s32.totalorder %s24, 5
      %p61 = por %p59, %p60
      %p63 = scmp.ne.s32.totalorder %s46, %s62
      %p64 = scmp.eq.s32.totalorder %s24, 0
      %p65 = por %p63, %p64
      %s67 = sadd.s32 %s66, 1
      %p70 = scmp.eq.s32.totalorder %s18, 5
      %p71 = scmp.ne.s32.totalorder %s66, %s68
      %p72 = scmp.eq.s32.totalorder %s18, 0
      %p73 = por %p71, %p72
      %p74 = scmp.ne.s32.totalorder %s66, %s68
      %p75 = scmp.eq.s32.totalorder %s23, 5
      %p76 = por %p74, %p75
      %p77 = scmp.ne.s32.totalorder %s68, %s69
      %p78 = scmp.eq.s32.totalorder %s23, 0
      %p79 = por %p77, %p78
      %p80 = scmp.ne.s32.totalorder %s68, %s69
      %p81 = scmp.eq.s32.totalorder %s24, 5
      %p82 = por %p80, %p81
      %p84 = scmp.ne.s32.totalorder %s69, %s83
      %p85 = scmp.eq.s32.totalorder %s24, 0
      %p86 = por %p84, %p85
      %s87 = ssub.s32 %s25, %s37
      %p88 = scmp.eq.s32.totalorder %s87, 0
      %s90 = sadd.s32 %s89, 1
      %s91 = scalar_select %p88, %s89, %s90
      %p94 = pneg %p88
      %p95 = scmp.eq.s32.totalorder %s18, 5
      %p96 = por %p94, %p95
      %p97 = scmp.ne.s32.totalorder %s89, %s92
      %p98 = scmp.eq.s32.totalorder %s18, 0
      %p99 = por %p97, %p98
      %p100 = scmp.ne.s32.totalorder %s89, %s92
      %p101 = scmp.eq.s32.totalorder %s23, 5
      %p102 = por %p100, %p101
      %p103 = scmp.ne.s32.totalorder %s92, %s93
      %p104 = scmp.eq.s32.totalorder %s23, 0
      %p105 = por %p103, %p104
      %p106 = scmp.ne.s32.totalorder %s92, %s93
      %p107 = scmp.eq.s32.totalorder %s24, 5
      %p108 = por %p106, %p107
      %p110 = scmp.ne.s32.totalorder %s93, %s109
      %p111 = scmp.eq.s32.totalorder %s24, 0
      %p112 = por %p110, %p111
      %s114 = sadd.s32 %s113, 1
      %p117 = scmp.eq.s32.totalorder %s18, 5
      %p118 = scmp.ne.s32.totalorder %s113, %s115
      %p119 = scmp.eq.s32.totalorder %s18, 0
      %p120 = por %p118, %p119
      %p121 = scmp.ne.s32.totalorder %s113, %s115
      %p122 = scmp.eq.s32.totalorder %s23, 5
      %p123 = por %p121, %p122
      %p124 = scmp.ne.s32.totalorder %s115, %s116
      %p125 = scmp.eq.s32.totalorder %s23, 0
      %p126 = por %p124, %p125
      %p127 = scmp.ne.s32.totalorder %s115, %s116
      %p128 = scmp.eq.s32.totalorder %s24, 5
      %p129 = por %p127, %p128
      %p131 = scmp.ne.s32.totalorder %s116, %s130
      %p132 = scmp.eq.s32.totalorder %s24, 0
      %p133 = por %p131, %p132
      %s135 = sadd.s32 %s134, 1
      %p138 = scmp.eq.s32.totalorder %s18, 5
      %p139 = scmp.ne.s32.totalorder %s134, %s136
      %p140 = scmp.eq.s32.totalorder %s18, 0
      %p141 = por %p139, %p140
      %p142 = scmp.ne.s32.totalorder %s134, %s136
      %p143 = scmp.eq.s32.totalorder %s23, 5
      %p144 = por %p142, %p143
      %p145 = scmp.ne.s32.totalorder %s136, %s137
      %p146 = scmp.eq.s32.totalorder %s23, 0
      %p147 = por %p145, %p146
      %p148 = scmp.ne.s32.totalorder %s136, %s137
      %p149 = scmp.eq.s32.totalorder %s24, 5
      %p150 = por %p148, %p149
      %p152 = scmp.ne.s32.totalorder %s137, %s151
      %p153 = scmp.eq.s32.totalorder %s24, 0
      %p154 = por %p152, %p153
      %s155 = ssub.s32 %s25, %s37
      %p156 = scmp.eq.s32.totalorder %s155, 0
      %s158 = sadd.s32 %s157, 1
      %s159 = scalar_select %p156, %s157, %s158
      %p162 = pneg %p156
      %p163 = scmp.eq.s32.totalorder %s18, 5
      %p164 = por %p162, %p163
      %p165 = scmp.ne.s32.totalorder %s157, %s160
      %p166 = scmp.eq.s32.totalorder %s18, 0
      %p167 = por %p165, %p166
      %p168 = scmp.ne.s32.totalorder %s157, %s160
      %p169 = scmp.eq.s32.totalorder %s23, 5
      %p170 = por %p168, %p169
      %p171 = scmp.ne.s32.totalorder %s160, %s161
      %p172 = scmp.eq.s32.totalorder %s23, 0
      %p173 = por %p171, %p172
      %p174 = scmp.ne.s32.totalorder %s160, %s161
      %p175 = scmp.eq.s32.totalorder %s24, 5
      %p176 = por %p174, %p175
      %p178 = scmp.ne.s32.totalorder %s161, %s177
      %p179 = scmp.eq.s32.totalorder %s24, 0
      %p180 = por %p178, %p179
      %p181 = scmp.le.s32.totalorder 1, %s18
      %p182 = scmp.lt.s32.totalorder %s18, 7
      %p183 = pnand %p181, %p182
      %p184 = pneg %p183
      // Predicated region
      $region9: #{tpu_custom_call.1} parent=5 // pred_check
        _
      $region10: #{tpu_custom_call.1} parent=5 // pred_check_branch
        %186 = sbr.rel (%p183) target = $region12
      $region11: #{tpu_custom_call.1} parent=5 // pred_region
        %s187 = ssub.s32 %s18, 1
        // Predicated region
        $region13: #{tpu_custom_call.1} parent=11 // pred_check
          %p188 = pneg %p79
        $region14: #{tpu_custom_call.1} parent=11 // pred_check_branch
          %190 = sbr.rel (%p188) target = $region16
        $region15: #{tpu_custom_call.1} parent=11 // pred_region
          %s192 = ssub.s32 512, 512
          %193 = vsyncadd [#allocation7], %s192
          %s194 = sshll.u32 [#allocation6], 4
          %s195 = int_to_ptr.vmem [resolvable:$true] %s194
          %200 = dma.hbm_to_vmem [thread:$0]  %s1, 512, %s195, [#allocation7], 64, 64, 4
        $region16: #{tpu_custom_call.1} parent=11 // pred_fallthru
          _
        // Predicated region
        $region17: #{tpu_custom_call.1} parent=11 // pred_check
          %p201 = pneg %p126
        $region18: #{tpu_custom_call.1} parent=11 // pred_check_branch
          %203 = sbr.rel (%p201) target = $region20
        $region19: #{tpu_custom_call.1} parent=11 // pred_region
          %s205 = ssub.s32 2048, 2048
          %206 = vsyncadd [#allocation7], %s205
          %s207 = sshll.u32 [#allocation8], 4
          %s208 = int_to_ptr.vmem [resolvable:$true] %s207
          %213 = dma.hbm_to_vmem [thread:$0]  %s3, 2048, %s208, [#allocation7], 128, 128, 8
        $region20: #{tpu_custom_call.1} parent=11 // pred_fallthru
          _
        // Predicated region
        $region21: #{tpu_custom_call.1} parent=11 // pred_check
          %p214 = pneg %p147
        $region22: #{tpu_custom_call.1} parent=11 // pred_check_branch
          %216 = sbr.rel (%p214) target = $region24
        $region23: #{tpu_custom_call.1} parent=11 // pred_region
          _
        $region24: #{tpu_custom_call.1} parent=11 // pred_fallthru
          _
      $region12: #{tpu_custom_call.1} parent=5 // pred_fallthru
        _
      %p217 = scmp.lt.s32.totalorder %s18, 6
      // Predicated region
      $region25: #{tpu_custom_call.1} parent=5 // pred_check
        %p218 = pneg %p217
      $region26: #{tpu_custom_call.1} parent=5 // pred_check_branch
        %220 = sbr.rel (%p218) target = $region28
      $region27: #{tpu_custom_call.1} parent=5 // pred_region
        // Predicated region
        $region29: #{tpu_custom_call.1} parent=27 // pred_check
          %p221 = pneg %p52
        $region30: #{tpu_custom_call.1} parent=27 // pred_check_branch
          %223 = sbr.rel (%p221) target = $region32
        $region31: #{tpu_custom_call.1} parent=27 // pred_region
          %s224 = sand.u32 %s42, 1
          %s225 = scalar_lea.sflag [#allocation4], %s224
          %s226 = sand.u32 %s42, 1
          %s227 = smul.addr %s226, 8
          %s228 = scalar_lea.vmem [#allocation3], %s227
          %s229 = smul.u32 8, %s25
          %s231 = ssub.s32 128, 128
          %232 = vsyncadd %s225, %s231
          %s233 = smul.addr %s229, 2
          %s234 = sadd.s32 %s26, %s233
          %s235 = smul.addr %s234, 16
          %s236 = scalar_lea.hbm %s0, %s235
          %s237 = sshll.u32 %s228, 4
          %s238 = int_to_ptr.vmem [resolvable:$true] %s237
          %243 = dma.hbm_to_vmem [thread:$0]  %s236, 128, %s238, %s225, 32, 16, 1
        $region32: #{tpu_custom_call.1} parent=27 // pred_fallthru
          _
        // Predicated region
        $region33: #{tpu_custom_call.1} parent=27 // pred_check
          %p244 = pneg %p99
        $region34: #{tpu_custom_call.1} parent=27 // pred_check_branch
          %246 = sbr.rel (%p244) target = $region36
        $region35: #{tpu_custom_call.1} parent=27 // pred_region
          %p247 = scmp.lt.s32.totalorder %s25, 2
          %s248 = scalar_select %p247, %s25, 2
          %s249 = smul.addr %s248, 8
          %s250 = scalar_lea.vmem %s2, %s249
        $region36: #{tpu_custom_call.1} parent=27 // pred_fallthru
          _
      $region28: #{tpu_custom_call.1} parent=5 // pred_fallthru
        _
      %p251 = scmp.le.s32.totalorder 1, %s18
      %p252 = scmp.lt.s32.totalorder %s18, 7
      %p253 = pnand %p251, %p252
      %p254 = pneg %p253
      // Predicated region
      $region37: #{tpu_custom_call.1} parent=5 // pred_check
        _
      $region38: #{tpu_custom_call.1} parent=5 // pred_check_branch
        %256 = sbr.rel (%p253) target = $region40
      $region39: #{tpu_custom_call.1} parent=5 // pred_region
        %s257 = ssub.s32 %s18, 1
        %s258 = sand.u32 %s45, 1
        %s259 = scalar_lea.sflag [#allocation4], %s258
        %s260 = sand.u32 %s45, 1
        %s261 = smul.addr %s260, 8
        %s262 = scalar_lea.vmem [#allocation3], %s261
        // Predicated region
        $region41: #{tpu_custom_call.1} parent=39 // pred_check
          %p263 = pneg %p58
        $region42: #{tpu_custom_call.1} parent=39 // pred_check_branch
          %265 = sbr.rel (%p263) target = $region44
        $region43: #{tpu_custom_call.1} parent=39 // pred_region
          %266 = dma.done %s259, 128
        $region44: #{tpu_custom_call.1} parent=39 // pred_fallthru
          _
        // Predicated region
        $region45: #{tpu_custom_call.1} parent=39 // pred_check
          %p267 = pneg %p79
        $region46: #{tpu_custom_call.1} parent=39 // pred_check_branch
          %269 = sbr.rel (%p267) target = $region48
        $region47: #{tpu_custom_call.1} parent=39 // pred_region
          %270 = dma.done [#allocation7], 512
        $region48: #{tpu_custom_call.1} parent=39 // pred_fallthru
          _
        // Predicated region
        $region49: #{tpu_custom_call.1} parent=39 // pred_check
          %p271 = pneg %p126
        $region50: #{tpu_custom_call.1} parent=39 // pred_check_branch
          %273 = sbr.rel (%p271) target = $region52
        $region51: #{tpu_custom_call.1} parent=39 // pred_region
          %274 = dma.done [#allocation7], 2048
        $region52: #{tpu_custom_call.1} parent=39 // pred_fallthru
          _
        %s275 = sand.u32 %s45, 1
        %s276 = scalar_lea.sflag [#allocation4], %s275
        %s277 = sand.u32 %s45, 1
        %s278 = smul.addr %s277, 8
        %s279 = scalar_lea.vmem [#allocation3], %s278
        %p280 = pneg %p58
        %p281 = pneg %p55
        %p282 = pneg %p79
        %p283 = pneg %p76
        %p284 = scmp.lt.s32.totalorder %s27, 2
        %s285 = scalar_select %p284, %s27, 2
        %s286 = smul.addr %s285, 8
        %s287 = scalar_lea.vmem %s2, %s286
        %p288 = pneg %p105
        %p289 = pneg %p102
        %p290 = pneg %p126
        %p291 = pneg %p123
        %p292 = pneg %p147
        %p293 = pneg %p144
        %p294 = pneg %p173
        %p295 = pneg %p170
        %s296 = sand.u32 %s160, 1
        %s297 = scalar_lea.sflag [#allocation5], %s296
        %s298 = sand.u32 %s160, 1
        %s299 = smul.addr %s298, 8
        %s300 = scalar_lea.vmem [#allocation9], %s299
        %s301 = smul.u32 8, %s27
        %p302 = scmp.lt.s32.totalorder %s27, 2
        %s303 = scalar_select %p302, %s27, 2
        %s304 = smul.addr %s303, 8
        %s305 = scalar_lea.vmem %s2, %s304
        %p307 = scmp.eq.s32.totalorder %s28, 0
        // Predicated region
        $region53: #{tpu_custom_call.1} parent=39 // pred_check
          %p308 = pneg %p307
        $region54: #{tpu_custom_call.1} parent=39 // pred_check_branch
          %310 = sbr.rel (%p308) target = $region56
        $region55: #{tpu_custom_call.1} parent=39 // pred_region
          %311 = vst [vmem:[#allocation2] sm:$0xff] 0.0
        $region56: #{tpu_custom_call.1} parent=39 // pred_fallthru
          _
        %v312 = vld [vmem:[%s262] sm:$0x1]
        %v313 = vld [vmem:[%s262 + $0x1] sm:$0x1]
        %v314 = vld [vmem:[%s262 + $0x2] sm:$0x1]
        %v315 = vld [vmem:[%s262 + $0x3] sm:$0x1]
        %v316 = vld [vmem:[%s262 + $0x4] sm:$0x1]
        %v317 = vld [vmem:[%s262 + $0x5] sm:$0x1]
        %v318 = vld [vmem:[%s262 + $0x6] sm:$0x1]
        %v319 = vld [vmem:[%s262 + $0x7] sm:$0x1]
        %v320 = vlaneseq
        %v321 = vshrl.u32 %v320, 7
        %v322 = vadd.s32 %v321, 8
        %v323 = vadd.s32 %v321, 16
        %v324 = vadd.s32 %v321, 24
        %v325 = vadd.s32 %v321, 32
        %v326 = vadd.s32 %v321, 40
        %v327 = vadd.s32 %v321, 48
        %v328 = vadd.s32 %v321, 56
        %v329 = vlaneseq
        %v330 = vshrl.u32 %v329, 7
        %v331 = vsub.s32 0, %v330
        %v332 = vrot.slane %v312, %v331
        %v333 = vlaneseq
        %v334 = vshrl.u32 %v333, 7
        %v335 = vsub.s32 0, %v334
        %v336 = vrot.slane %v313, %v335
        %v337 = vlaneseq
        %v338 = vshrl.u32 %v337, 7
        %v339 = vsub.s32 0, %v338
        %v340 = vrot.slane %v314, %v339
        %v341 = vlaneseq
        %v342 = vshrl.u32 %v341, 7
        %v343 = vsub.s32 0, %v342
        %v344 = vrot.slane %v315, %v343
        %v345 = vlaneseq
        %v346 = vshrl.u32 %v345, 7
        %v347 = vsub.s32 0, %v346
        %v348 = vrot.slane %v316, %v347
        %v349 = vlaneseq
        %v350 = vshrl.u32 %v349, 7
        %v351 = vsub.s32 0, %v350
        %v352 = vrot.slane %v317, %v351
        %v353 = vlaneseq
        %v354 = vshrl.u32 %v353, 7
        %v355 = vsub.s32 0, %v354
        %v356 = vrot.slane %v318, %v355
        %v357 = vlaneseq
        %v358 = vshrl.u32 %v357, 7
        %v359 = vsub.s32 0, %v358
        %v360 = vrot.slane %v319, %v359
        %vm361 = vcmp.eq.s32.totalorder %v332, %v321
        %vm362 = vcmp.eq.s32.totalorder %v332, %v322
        %vm363 = vcmp.eq.s32.totalorder %v332, %v323
        %vm364 = vcmp.eq.s32.totalorder %v332, %v324
        %vm365 = vcmp.eq.s32.totalorder %v332, %v325
        %vm366 = vcmp.eq.s32.totalorder %v332, %v326
        %vm367 = vcmp.eq.s32.totalorder %v332, %v327
        %vm368 = vcmp.eq.s32.totalorder %v332, %v328
        %vm369 = vcmp.eq.s32.totalorder %v336, %v321
        %vm370 = vcmp.eq.s32.totalorder %v336, %v322
        %vm371 = vcmp.eq.s32.totalorder %v336, %v323
        %vm372 = vcmp.eq.s32.totalorder %v336, %v324
        %vm373 = vcmp.eq.s32.totalorder %v336, %v325
        %vm374 = vcmp.eq.s32.totalorder %v336, %v326
        %vm375 = vcmp.eq.s32.totalorder %v336, %v327
        %vm376 = vcmp.eq.s32.totalorder %v336, %v328
        %vm377 = vcmp.eq.s32.totalorder %v340, %v321
        %vm378 = vcmp.eq.s32.totalorder %v340, %v322
        %vm379 = vcmp.eq.s32.totalorder %v340, %v323
        %vm380 = vcmp.eq.s32.totalorder %v340, %v324
        %vm381 = vcmp.eq.s32.totalorder %v340, %v325
        %vm382 = vcmp.eq.s32.totalorder %v340, %v326
        %vm383 = vcmp.eq.s32.totalorder %v340, %v327
        %vm384 = vcmp.eq.s32.totalorder %v340, %v328
        %vm385 = vcmp.eq.s32.totalorder %v344, %v321
        %vm386 = vcmp.eq.s32.totalorder %v344, %v322
        %vm387 = vcmp.eq.s32.totalorder %v344, %v323
        %vm388 = vcmp.eq.s32.totalorder %v344, %v324
        %vm389 = vcmp.eq.s32.totalorder %v344, %v325
        %vm390 = vcmp.eq.s32.totalorder %v344, %v326
        %vm391 = vcmp.eq.s32.totalorder %v344, %v327
        %vm392 = vcmp.eq.s32.totalorder %v344, %v328
        %vm393 = vcmp.eq.s32.totalorder %v348, %v321
        %vm394 = vcmp.eq.s32.totalorder %v348, %v322
        %vm395 = vcmp.eq.s32.totalorder %v348, %v323
        %vm396 = vcmp.eq.s32.totalorder %v348, %v324
        %vm397 = vcmp.eq.s32.totalorder %v348, %v325
        %vm398 = vcmp.eq.s32.totalorder %v348, %v326
        %vm399 = vcmp.eq.s32.totalorder %v348, %v327
        %vm400 = vcmp.eq.s32.totalorder %v348, %v328
        %vm401 = vcmp.eq.s32.totalorder %v352, %v321
        %vm402 = vcmp.eq.s32.totalorder %v352, %v322
        %vm403 = vcmp.eq.s32.totalorder %v352, %v323
        %vm404 = vcmp.eq.s32.totalorder %v352, %v324
        %vm405 = vcmp.eq.s32.totalorder %v352, %v325
        %vm406 = vcmp.eq.s32.totalorder %v352, %v326
        %vm407 = vcmp.eq.s32.totalorder %v352, %v327
        %vm408 = vcmp.eq.s32.totalorder %v352, %v328
        %vm409 = vcmp.eq.s32.totalorder %v356, %v321
        %vm410 = vcmp.eq.s32.totalorder %v356, %v322
        %vm411 = vcmp.eq.s32.totalorder %v356, %v323
        %vm412 = vcmp.eq.s32.totalorder %v356, %v324
        %vm413 = vcmp.eq.s32.totalorder %v356, %v325
        %vm414 = vcmp.eq.s32.totalorder %v356, %v326
        %vm415 = vcmp.eq.s32.totalorder %v356, %v327
        %vm416 = vcmp.eq.s32.totalorder %v356, %v328
        %vm417 = vcmp.eq.s32.totalorder %v360, %v321
        %vm418 = vcmp.eq.s32.totalorder %v360, %v322
        %vm419 = vcmp.eq.s32.totalorder %v360, %v323
        %vm420 = vcmp.eq.s32.totalorder %v360, %v324
        %vm421 = vcmp.eq.s32.totalorder %v360, %v325
        %vm422 = vcmp.eq.s32.totalorder %v360, %v326
        %vm423 = vcmp.eq.s32.totalorder %v360, %v327
        %vm424 = vcmp.eq.s32.totalorder %v360, %v328
        %vm425 = vcmp.ne.s32.totalorder %v321, 1
        %vm426 = vcmp.ne.s32.totalorder %v322, 1
        %vm427 = vcmp.ne.s32.totalorder %v323, 1
        %vm428 = vcmp.ne.s32.totalorder %v324, 1
        %vm429 = vcmp.ne.s32.totalorder %v325, 1
        %vm430 = vcmp.ne.s32.totalorder %v326, 1
        %vm431 = vcmp.ne.s32.totalorder %v327, 1
        %vm432 = vcmp.ne.s32.totalorder %v328, 1
        %vm433 = vmand %vm361, %vm425
        %vm434 = vmand %vm362, %vm426
        %vm435 = vmand %vm363, %vm427
        %vm436 = vmand %vm364, %vm428
        %vm437 = vmand %vm365, %vm429
        %vm438 = vmand %vm366, %vm430
        %vm439 = vmand %vm367, %vm431
        %vm440 = vmand %vm368, %vm432
        %vm441 = vmand %vm369, %vm425
        %vm442 = vmand %vm370, %vm426
        %vm443 = vmand %vm371, %vm427
        %vm444 = vmand %vm372, %vm428
        %vm445 = vmand %vm373, %vm429
        %vm446 = vmand %vm374, %vm430
        %vm447 = vmand %vm375, %vm431
        %vm448 = vmand %vm376, %vm432
        %vm449 = vmand %vm377, %vm425
        %vm450 = vmand %vm378, %vm426
        %vm451 = vmand %vm379, %vm427
        %vm452 = vmand %vm380, %vm428
        %vm453 = vmand %vm381, %vm429
        %vm454 = vmand %vm382, %vm430
        %vm455 = vmand %vm383, %vm431
        %vm456 = vmand %vm384, %vm432
        %vm457 = vmand %vm385, %vm425
        %vm458 = vmand %vm386, %vm426
        %vm459 = vmand %vm387, %vm427
        %vm460 = vmand %vm388, %vm428
        %vm461 = vmand %vm389, %vm429
        %vm462 = vmand %vm390, %vm430
        %vm463 = vmand %vm391, %vm431
        %vm464 = vmand %vm392, %vm432
        %vm465 = vmand %vm393, %vm425
        %vm466 = vmand %vm394, %vm426
        %vm467 = vmand %vm395, %vm427
        %vm468 = vmand %vm396, %vm428
        %vm469 = vmand %vm397, %vm429
        %vm470 = vmand %vm398, %vm430
        %vm471 = vmand %vm399, %vm431
        %vm472 = vmand %vm400, %vm432
        %vm473 = vmand %vm401, %vm425
        %vm474 = vmand %vm402, %vm426
        %vm475 = vmand %vm403, %vm427
        %vm476 = vmand %vm404, %vm428
        %vm477 = vmand %vm405, %vm429
        %vm478 = vmand %vm406, %vm430
        %vm479 = vmand %vm407, %vm431
        %vm480 = vmand %vm408, %vm432
        %vm481 = vmand %vm409, %vm425
        %vm482 = vmand %vm410, %vm426
        %vm483 = vmand %vm411, %vm427
        %vm484 = vmand %vm412, %vm428
        %vm485 = vmand %vm413, %vm429
        %vm486 = vmand %vm414, %vm430
        %vm487 = vmand %vm415, %vm431
        %vm488 = vmand %vm416, %vm432
        %vm489 = vmand %vm417, %vm425
        %vm490 = vmand %vm418, %vm426
        %vm491 = vmand %vm419, %vm427
        %vm492 = vmand %vm420, %vm428
        %vm493 = vmand %vm421, %vm429
        %vm494 = vmand %vm422, %vm430
        %vm495 = vmand %vm423, %vm431
        %vm496 = vmand %vm424, %vm432
        %v497 = vsel %vm433, 1.0, 0.0
        %v498 = vsel %vm434, 1.0, 0.0
        %v499 = vsel %vm435, 1.0, 0.0
        %v500 = vsel %vm436, 1.0, 0.0
        %v501 = vsel %vm437, 1.0, 0.0
        %v502 = vsel %vm438, 1.0, 0.0
        %v503 = vsel %vm439, 1.0, 0.0
        %v504 = vsel %vm440, 1.0, 0.0
        %v505 = vsel %vm441, 1.0, 0.0
        %v506 = vsel %vm442, 1.0, 0.0
        %v507 = vsel %vm443, 1.0, 0.0
        %v508 = vsel %vm444, 1.0, 0.0
        %v509 = vsel %vm445, 1.0, 0.0
        %v510 = vsel %vm446, 1.0, 0.0
        %v511 = vsel %vm447, 1.0, 0.0
        %v512 = vsel %vm448, 1.0, 0.0
        %v513 = vsel %vm449, 1.0, 0.0
        %v514 = vsel %vm450, 1.0, 0.0
        %v515 = vsel %vm451, 1.0, 0.0
        %v516 = vsel %vm452, 1.0, 0.0
        %v517 = vsel %vm453, 1.0, 0.0
        %v518 = vsel %vm454, 1.0, 0.0
        %v519 = vsel %vm455, 1.0, 0.0
        %v520 = vsel %vm456, 1.0, 0.0
        %v521 = vsel %vm457, 1.0, 0.0
        %v522 = vsel %vm458, 1.0, 0.0
        %v523 = vsel %vm459, 1.0, 0.0
        %v524 = vsel %vm460, 1.0, 0.0
        %v525 = vsel %vm461, 1.0, 0.0
        %v526 = vsel %vm462, 1.0, 0.0
        %v527 = vsel %vm463, 1.0, 0.0
        %v528 = vsel %vm464, 1.0, 0.0
        %v529 = vsel %vm465, 1.0, 0.0
        %v530 = vsel %vm466, 1.0, 0.0
        %v531 = vsel %vm467, 1.0, 0.0
        %v532 = vsel %vm468, 1.0, 0.0
        %v533 = vsel %vm469, 1.0, 0.0
        %v534 = vsel %vm470, 1.0, 0.0
        %v535 = vsel %vm471, 1.0, 0.0
        %v536 = vsel %vm472, 1.0, 0.0
        %v537 = vsel %vm473, 1.0, 0.0
        %v538 = vsel %vm474, 1.0, 0.0
        %v539 = vsel %vm475, 1.0, 0.0
        %v540 = vsel %vm476, 1.0, 0.0
        %v541 = vsel %vm477, 1.0, 0.0
        %v542 = vsel %vm478, 1.0, 0.0
        %v543 = vsel %vm479, 1.0, 0.0
        %v544 = vsel %vm480, 1.0, 0.0
        %v545 = vsel %vm481, 1.0, 0.0
        %v546 = vsel %vm482, 1.0, 0.0
        %v547 = vsel %vm483, 1.0, 0.0
        %v548 = vsel %vm484, 1.0, 0.0
        %v549 = vsel %vm485, 1.0, 0.0
        %v550 = vsel %vm486, 1.0, 0.0
        %v551 = vsel %vm487, 1.0, 0.0
        %v552 = vsel %vm488, 1.0, 0.0
        %v553 = vsel %vm489, 1.0, 0.0
        %v554 = vsel %vm490, 1.0, 0.0
        %v555 = vsel %vm491, 1.0, 0.0
        %v556 = vsel %vm492, 1.0, 0.0
        %v557 = vsel %vm493, 1.0, 0.0
        %v558 = vsel %vm494, 1.0, 0.0
        %v559 = vsel %vm495, 1.0, 0.0
        %v560 = vsel %vm496, 1.0, 0.0
        %561 = vadd.xlane.f32.xlu0 %v497
        %v562 = vpop.xlane.xlu0 %561
        %563 = vadd.xlane.f32.xlu0 %v498
        %v564 = vpop.xlane.xlu0 %563
        %565 = vadd.xlane.f32.xlu0 %v499
        %v566 = vpop.xlane.xlu0 %565
        %567 = vadd.xlane.f32.xlu0 %v500
        %v568 = vpop.xlane.xlu0 %567
        %569 = vadd.xlane.f32.xlu0 %v501
        %v570 = vpop.xlane.xlu0 %569
        %571 = vadd.xlane.f32.xlu0 %v502
        %v572 = vpop.xlane.xlu0 %571
        %573 = vadd.xlane.f32.xlu0 %v503
        %v574 = vpop.xlane.xlu0 %573
        %575 = vadd.xlane.f32.xlu0 %v504
        %v576 = vpop.xlane.xlu0 %575
        %577 = vadd.xlane.f32.xlu0 %v505
        %v578 = vpop.xlane.xlu0 %577
        %579 = vadd.xlane.f32.xlu0 %v506
        %v580 = vpop.xlane.xlu0 %579
        %581 = vadd.xlane.f32.xlu0 %v507
        %v582 = vpop.xlane.xlu0 %581
        %583 = vadd.xlane.f32.xlu0 %v508
        %v584 = vpop.xlane.xlu0 %583
        %585 = vadd.xlane.f32.xlu0 %v509
        %v586 = vpop.xlane.xlu0 %585
        %587 = vadd.xlane.f32.xlu0 %v510
        %v588 = vpop.xlane.xlu0 %587
        %589 = vadd.xlane.f32.xlu0 %v511
        %v590 = vpop.xlane.xlu0 %589
        %591 = vadd.xlane.f32.xlu0 %v512
        %v592 = vpop.xlane.xlu0 %591
        %593 = vadd.xlane.f32.xlu0 %v513
        %v594 = vpop.xlane.xlu0 %593
        %595 = vadd.xlane.f32.xlu0 %v514
        %v596 = vpop.xlane.xlu0 %595
        %597 = vadd.xlane.f32.xlu0 %v515
        %v598 = vpop.xlane.xlu0 %597
        %599 = vadd.xlane.f32.xlu0 %v516
        %v600 = vpop.xlane.xlu0 %599
        %601 = vadd.xlane.f32.xlu0 %v517
        %v602 = vpop.xlane.xlu0 %601
        %603 = vadd.xlane.f32.xlu0 %v518
        %v604 = vpop.xlane.xlu0 %603
        %605 = vadd.xlane.f32.xlu0 %v519
        %v606 = vpop.xlane.xlu0 %605
        %607 = vadd.xlane.f32.xlu0 %v520
        %v608 = vpop.xlane.xlu0 %607
        %609 = vadd.xlane.f32.xlu0 %v521
        %v610 = vpop.xlane.xlu0 %609
        %611 = vadd.xlane.f32.xlu0 %v522
        %v612 = vpop.xlane.xlu0 %611
        %613 = vadd.xlane.f32.xlu0 %v523
        %v614 = vpop.xlane.xlu0 %613
        %615 = vadd.xlane.f32.xlu0 %v524
        %v616 = vpop.xlane.xlu0 %615
        %617 = vadd.xlane.f32.xlu0 %v525
        %v618 = vpop.xlane.xlu0 %617
        %619 = vadd.xlane.f32.xlu0 %v526
        %v620 = vpop.xlane.xlu0 %619
        %621 = vadd.xlane.f32.xlu0 %v527
        %v622 = vpop.xlane.xlu0 %621
        %623 = vadd.xlane.f32.xlu0 %v528
        %v624 = vpop.xlane.xlu0 %623
        %625 = vadd.xlane.f32.xlu0 %v529
        %v626 = vpop.xlane.xlu0 %625
        %627 = vadd.xlane.f32.xlu0 %v530
        %v628 = vpop.xlane.xlu0 %627
        %629 = vadd.xlane.f32.xlu0 %v531
        %v630 = vpop.xlane.xlu0 %629
        %631 = vadd.xlane.f32.xlu0 %v532
        %v632 = vpop.xlane.xlu0 %631
        %633 = vadd.xlane.f32.xlu0 %v533
        %v634 = vpop.xlane.xlu0 %633
        %635 = vadd.xlane.f32.xlu0 %v534
        %v636 = vpop.xlane.xlu0 %635
        %637 = vadd.xlane.f32.xlu0 %v535
        %v638 = vpop.xlane.xlu0 %637
        %639 = vadd.xlane.f32.xlu0 %v536
        %v640 = vpop.xlane.xlu0 %639
        %641 = vadd.xlane.f32.xlu0 %v537
        %v642 = vpop.xlane.xlu0 %641
        %643 = vadd.xlane.f32.xlu0 %v538
        %v644 = vpop.xlane.xlu0 %643
        %645 = vadd.xlane.f32.xlu0 %v539
        %v646 = vpop.xlane.xlu0 %645
        %647 = vadd.xlane.f32.xlu0 %v540
        %v648 = vpop.xlane.xlu0 %647
        %649 = vadd.xlane.f32.xlu0 %v541
        %v650 = vpop.xlane.xlu0 %649
        %651 = vadd.xlane.f32.xlu0 %v542
        %v652 = vpop.xlane.xlu0 %651
        %653 = vadd.xlane.f32.xlu0 %v543
        %v654 = vpop.xlane.xlu0 %653
        %655 = vadd.xlane.f32.xlu0 %v544
        %v656 = vpop.xlane.xlu0 %655
        %657 = vadd.xlane.f32.xlu0 %v545
        %v658 = vpop.xlane.xlu0 %657
        %659 = vadd.xlane.f32.xlu0 %v546
        %v660 = vpop.xlane.xlu0 %659
        %661 = vadd.xlane.f32.xlu0 %v547
        %v662 = vpop.xlane.xlu0 %661
        %663 = vadd.xlane.f32.xlu0 %v548
        %v664 = vpop.xlane.xlu0 %663
        %665 = vadd.xlane.f32.xlu0 %v549
        %v666 = vpop.xlane.xlu0 %665
        %667 = vadd.xlane.f32.xlu0 %v550
        %v668 = vpop.xlane.xlu0 %667
        %669 = vadd.xlane.f32.xlu0 %v551
        %v670 = vpop.xlane.xlu0 %669
        %671 = vadd.xlane.f32.xlu0 %v552
        %v672 = vpop.xlane.xlu0 %671
        %673 = vadd.xlane.f32.xlu0 %v553
        %v674 = vpop.xlane.xlu0 %673
        %675 = vadd.xlane.f32.xlu0 %v554
        %v676 = vpop.xlane.xlu0 %675
        %677 = vadd.xlane.f32.xlu0 %v555
        %v678 = vpop.xlane.xlu0 %677
        %679 = vadd.xlane.f32.xlu0 %v556
        %v680 = vpop.xlane.xlu0 %679
        %681 = vadd.xlane.f32.xlu0 %v557
        %v682 = vpop.xlane.xlu0 %681
        %683 = vadd.xlane.f32.xlu0 %v558
        %v684 = vpop.xlane.xlu0 %683
        %685 = vadd.xlane.f32.xlu0 %v559
        %v686 = vpop.xlane.xlu0 %685
        %687 = vadd.xlane.f32.xlu0 %v560
        %v688 = vpop.xlane.xlu0 %687
        %v689 = vld [vmem:[#allocation2] sm:$0xff]
        %v690 = vpack.c.bf16 %v564, %v562
        %v691 = vpack.c.bf16 %v568, %v566
        %v692 = vpack.c.bf16 %v572, %v570
        %v693 = vpack.c.bf16 %v576, %v574
        %v694 = vpack.c.bf16 %v580, %v578
        %v695 = vpack.c.bf16 %v584, %v582
        %v696 = vpack.c.bf16 %v588, %v586
        %v697 = vpack.c.bf16 %v592, %v590
        %v698 = vpack.c.bf16 %v596, %v594
        %v699 = vpack.c.bf16 %v600, %v598
        %v700 = vpack.c.bf16 %v604, %v602
        %v701 = vpack.c.bf16 %v608, %v606
        %v702 = vpack.c.bf16 %v612, %v610
        %v703 = vpack.c.bf16 %v616, %v614
        %v704 = vpack.c.bf16 %v620, %v618
        %v705 = vpack.c.bf16 %v624, %v622
        %v706 = vpack.c.bf16 %v628, %v626
        %v707 = vpack.c.bf16 %v632, %v630
        %v708 = vpack.c.bf16 %v636, %v634
        %v709 = vpack.c.bf16 %v640, %v638
        %v710 = vpack.c.bf16 %v644, %v642
        %v711 = vpack.c.bf16 %v648, %v646
        %v712 = vpack.c.bf16 %v652, %v650
        %v713 = vpack.c.bf16 %v656, %v654
        %v714 = vpack.c.bf16 %v660, %v658
        %v715 = vpack.c.bf16 %v664, %v662
        %v716 = vpack.c.bf16 %v668, %v666
        %v717 = vpack.c.bf16 %v672, %v670
        %v718 = vpack.c.bf16 %v676, %v674
        %v719 = vpack.c.bf16 %v680, %v678
        %v720 = vpack.c.bf16 %v684, %v682
        %v721 = vpack.c.bf16 %v688, %v686
        %v722 = vld [vmem:[#allocation6] sm:$0xf]
        %v723 = vld [vmem:[#allocation6 + $0x4] sm:$0xf]
        %v724 = vld [vmem:[#allocation6 + $0x8] sm:$0xf]
        %v725 = vld [vmem:[#allocation6 + $0xc] sm:$0xf]
        %v726 = vld [vmem:[#allocation6 + $0x10] sm:$0xf]
        %v727 = vld [vmem:[#allocation6 + $0x14] sm:$0xf]
        %v728 = vld [vmem:[#allocation6 + $0x18] sm:$0xf]
        %v729 = vld [vmem:[#allocation6 + $0x1c] sm:$0xf]
        %v762 = vunpack.c.l.b16 %v690
        %v763 = vunpack.c.h.b16 %v690
        %v764 = vunpack.c.l.b16 %v691
        %v765 = vunpack.c.h.b16 %v691
        %v766 = vunpack.c.l.b16 %v692
        %v767 = vunpack.c.h.b16 %v692
        %v768 = vunpack.c.l.b16 %v693
        %v769 = vunpack.c.h.b16 %v693
        %v770 = vunpack.c.l.b16 %v694
        %v771 = vunpack.c.h.b16 %v694
        %v772 = vunpack.c.l.b16 %v695
        %v773 = vunpack.c.h.b16 %v695
        %v774 = vunpack.c.l.b16 %v696
        %v775 = vunpack.c.h.b16 %v696
        %v776 = vunpack.c.l.b16 %v697
        %v777 = vunpack.c.h.b16 %v697
        %v778 = vunpack.c.l.b16 %v698
        %v779 = vunpack.c.h.b16 %v698
        %v780 = vunpack.c.l.b16 %v699
        %v781 = vunpack.c.h.b16 %v699
        %v782 = vunpack.c.l.b16 %v700
        %v783 = vunpack.c.h.b16 %v700
        %v784 = vunpack.c.l.b16 %v701
        %v785 = vunpack.c.h.b16 %v701
        %v786 = vunpack.c.l.b16 %v702
        %v787 = vunpack.c.h.b16 %v702
        %v788 = vunpack.c.l.b16 %v703
        %v789 = vunpack.c.h.b16 %v703
        %v790 = vunpack.c.l.b16 %v704
        %v791 = vunpack.c.h.b16 %v704
        %v792 = vunpack.c.l.b16 %v705
        %v793 = vunpack.c.h.b16 %v705
        %v794 = vunpack.c.l.b16 %v706
        %v795 = vunpack.c.h.b16 %v706
        %v796 = vunpack.c.l.b16 %v707
        %v797 = vunpack.c.h.b16 %v707
        %v798 = vunpack.c.l.b16 %v708
        %v799 = vunpack.c.h.b16 %v708
        %v800 = vunpack.c.l.b16 %v709
        %v801 = vunpack.c.h.b16 %v709
        %v802 = vunpack.c.l.b16 %v710
        %v803 = vunpack.c.h.b16 %v710
        %v804 = vunpack.c.l.b16 %v711
        %v805 = vunpack.c.h.b16 %v711
        %v806 = vunpack.c.l.b16 %v712
        %v807 = vunpack.c.h.b16 %v712
        %v808 = vunpack.c.l.b16 %v713
        %v809 = vunpack.c.h.b16 %v713
        %v810 = vunpack.c.l.b16 %v714
        %v811 = vunpack.c.h.b16 %v714
        %v812 = vunpack.c.l.b16 %v715
        %v813 = vunpack.c.h.b16 %v715
        %v814 = vunpack.c.l.b16 %v716
        %v815 = vunpack.c.h.b16 %v716
        %v816 = vunpack.c.l.b16 %v717
        %v817 = vunpack.c.h.b16 %v717
        %v818 = vunpack.c.l.b16 %v718
        %v819 = vunpack.c.h.b16 %v718
        %v820 = vunpack.c.l.b16 %v719
        %v821 = vunpack.c.h.b16 %v719
        %v822 = vunpack.c.l.b16 %v720
        %v823 = vunpack.c.h.b16 %v720
        %v824 = vunpack.c.l.b16 %v721
        %v825 = vunpack.c.h.b16 %v721
        %v826 = vlaneseq
        %v827 = vand.u32 %v826, 127
        %v828 = vlaneseq
        %v829 = vshrl.u32 %v828, 7
        %v830 = vsub.s32 %v827, %v829
        %v831 = vrot.slane %v762, %v830
        %v832 = vadd.s32 %v827, 4294967288
        %v833 = vlaneseq
        %v834 = vshrl.u32 %v833, 7
        %v835 = vsub.s32 %v832, %v834
        %v836 = vrot.slane %v763, %v835
        %vm837 = vcmask 130112
        %v838 = vsel %vm837, %v836, %v831
        %v839 = vadd.s32 %v827, 4294967280
        %v840 = vlaneseq
        %v841 = vshrl.u32 %v840, 7
        %v842 = vsub.s32 %v839, %v841
        %v843 = vrot.slane %v764, %v842
        %vm844 = vcmask 195712
        %v845 = vsel %vm844, %v843, %v838
        %v846 = vadd.s32 %v827, 4294967272
        %v847 = vlaneseq
        %v848 = vshrl.u32 %v847, 7
        %v849 = vsub.s32 %v846, %v848
        %v850 = vrot.slane %v765, %v849
        %vm851 = vcmask 261312
        %v852 = vsel %vm851, %v850, %v845
        %v853 = vadd.s32 %v827, 4294967264
        %v854 = vlaneseq
        %v855 = vshrl.u32 %v854, 7
        %v856 = vsub.s32 %v853, %v855
        %v857 = vrot.slane %v766, %v856
        %vm858 = vcmask 326912
        %v859 = vsel %vm858, %v857, %v852
        %v860 = vadd.s32 %v827, 4294967256
        %v861 = vlaneseq
        %v862 = vshrl.u32 %v861, 7
        %v863 = vsub.s32 %v860, %v862
        %v864 = vrot.slane %v767, %v863
        %vm865 = vcmask 392512
        %v866 = vsel %vm865, %v864, %v859
        %v867 = vadd.s32 %v827, 4294967248
        %v868 = vlaneseq
        %v869 = vshrl.u32 %v868, 7
        %v870 = vsub.s32 %v867, %v869
        %v871 = vrot.slane %v768, %v870
        %vm872 = vcmask 458112
        %v873 = vsel %vm872, %v871, %v866
        %v874 = vadd.s32 %v827, 4294967240
        %v875 = vlaneseq
        %v876 = vshrl.u32 %v875, 7
        %v877 = vsub.s32 %v874, %v876
        %v878 = vrot.slane %v769, %v877
        %vm879 = vcmask 523712
        %v880 = vsel %vm879, %v878, %v873
        %v881 = vlaneseq
        %v882 = vshrl.u32 %v881, 7
        %v883 = vsub.s32 %v827, %v882
        %v884 = vrot.slane %v770, %v883
        %v885 = vlaneseq
        %v886 = vshrl.u32 %v885, 7
        %v887 = vsub.s32 %v832, %v886
        %v888 = vrot.slane %v771, %v887
        %v889 = vsel %vm837, %v888, %v884
        %v890 = vlaneseq
        %v891 = vshrl.u32 %v890, 7
        %v892 = vsub.s32 %v839, %v891
        %v893 = vrot.slane %v772, %v892
        %v894 = vsel %vm844, %v893, %v889
        %v895 = vlaneseq
        %v896 = vshrl.u32 %v895, 7
        %v897 = vsub.s32 %v846, %v896
        %v898 = vrot.slane %v773, %v897
        %v899 = vsel %vm851, %v898, %v894
        %v900 = vlaneseq
        %v901 = vshrl.u32 %v900, 7
        %v902 = vsub.s32 %v853, %v901
        %v903 = vrot.slane %v774, %v902
        %v904 = vsel %vm858, %v903, %v899
        %v905 = vlaneseq
        %v906 = vshrl.u32 %v905, 7
        %v907 = vsub.s32 %v860, %v906
        %v908 = vrot.slane %v775, %v907
        %v909 = vsel %vm865, %v908, %v904
        %v910 = vlaneseq
        %v911 = vshrl.u32 %v910, 7
        %v912 = vsub.s32 %v867, %v911
        %v913 = vrot.slane %v776, %v912
        %v914 = vsel %vm872, %v913, %v909
        %v915 = vlaneseq
        %v916 = vshrl.u32 %v915, 7
        %v917 = vsub.s32 %v874, %v916
        %v918 = vrot.slane %v777, %v917
        %v919 = vsel %vm879, %v918, %v914
        %v920 = vlaneseq
        %v921 = vshrl.u32 %v920, 7
        %v922 = vsub.s32 %v827, %v921
        %v923 = vrot.slane %v778, %v922
        %v924 = vlaneseq
        %v925 = vshrl.u32 %v924, 7
        %v926 = vsub.s32 %v832, %v925
        %v927 = vrot.slane %v779, %v926
        %v928 = vsel %vm837, %v927, %v923
        %v929 = vlaneseq
        %v930 = vshrl.u32 %v929, 7
        %v931 = vsub.s32 %v839, %v930
        %v932 = vrot.slane %v780, %v931
        %v933 = vsel %vm844, %v932, %v928
        %v934 = vlaneseq
        %v935 = vshrl.u32 %v934, 7
        %v936 = vsub.s32 %v846, %v935
        %v937 = vrot.slane %v781, %v936
        %v938 = vsel %vm851, %v937, %v933
        %v939 = vlaneseq
        %v940 = vshrl.u32 %v939, 7
        %v941 = vsub.s32 %v853, %v940
        %v942 = vrot.slane %v782, %v941
        %v943 = vsel %vm858, %v942, %v938
        %v944 = vlaneseq
        %v945 = vshrl.u32 %v944, 7
        %v946 = vsub.s32 %v860, %v945
        %v947 = vrot.slane %v783, %v946
        %v948 = vsel %vm865, %v947, %v943
        %v949 = vlaneseq
        %v950 = vshrl.u32 %v949, 7
        %v951 = vsub.s32 %v867, %v950
        %v952 = vrot.slane %v784, %v951
        %v953 = vsel %vm872, %v952, %v948
        %v954 = vlaneseq
        %v955 = vshrl.u32 %v954, 7
        %v956 = vsub.s32 %v874, %v955
        %v957 = vrot.slane %v785, %v956
        %v958 = vsel %vm879, %v957, %v953
        %v959 = vlaneseq
        %v960 = vshrl.u32 %v959, 7
        %v961 = vsub.s32 %v827, %v960
        %v962 = vrot.slane %v786, %v961
        %v963 = vlaneseq
        %v964 = vshrl.u32 %v963, 7
        %v965 = vsub.s32 %v832, %v964
        %v966 = vrot.slane %v787, %v965
        %v967 = vsel %vm837, %v966, %v962
        %v968 = vlaneseq
        %v969 = vshrl.u32 %v968, 7
        %v970 = vsub.s32 %v839, %v969
        %v971 = vrot.slane %v788, %v970
        %v972 = vsel %vm844, %v971, %v967
        %v973 = vlaneseq
        %v974 = vshrl.u32 %v973, 7
        %v975 = vsub.s32 %v846, %v974
        %v976 = vrot.slane %v789, %v975
        %v977 = vsel %vm851, %v976, %v972
        %v978 = vlaneseq
        %v979 = vshrl.u32 %v978, 7
        %v980 = vsub.s32 %v853, %v979
        %v981 = vrot.slane %v790, %v980
        %v982 = vsel %vm858, %v981, %v977
        %v983 = vlaneseq
        %v984 = vshrl.u32 %v983, 7
        %v985 = vsub.s32 %v860, %v984
        %v986 = vrot.slane %v791, %v985
        %v987 = vsel %vm865, %v986, %v982
        %v988 = vlaneseq
        %v989 = vshrl.u32 %v988, 7
        %v990 = vsub.s32 %v867, %v989
        %v991 = vrot.slane %v792, %v990
        %v992 = vsel %vm872, %v991, %v987
        %v993 = vlaneseq
        %v994 = vshrl.u32 %v993, 7
        %v995 = vsub.s32 %v874, %v994
        %v996 = vrot.slane %v793, %v995
        %v997 = vsel %vm879, %v996, %v992
        %v998 = vlaneseq
        %v999 = vshrl.u32 %v998, 7
        %v1000 = vsub.s32 %v827, %v999
        %v1001 = vrot.slane %v794, %v1000
        %v1002 = vlaneseq
        %v1003 = vshrl.u32 %v1002, 7
        %v1004 = vsub.s32 %v832, %v1003
        %v1005 = vrot.slane %v795, %v1004
        %v1006 = vsel %vm837, %v1005, %v1001
        %v1007 = vlaneseq
        %v1008 = vshrl.u32 %v1007, 7
        %v1009 = vsub.s32 %v839, %v1008
        %v1010 = vrot.slane %v796, %v1009
        %v1011 = vsel %vm844, %v1010, %v1006
        %v1012 = vlaneseq
        %v1013 = vshrl.u32 %v1012, 7
        %v1014 = vsub.s32 %v846, %v1013
        %v1015 = vrot.slane %v797, %v1014
        %v1016 = vsel %vm851, %v1015, %v1011
        %v1017 = vlaneseq
        %v1018 = vshrl.u32 %v1017, 7
        %v1019 = vsub.s32 %v853, %v1018
        %v1020 = vrot.slane %v798, %v1019
        %v1021 = vsel %vm858, %v1020, %v1016
        %v1022 = vlaneseq
        %v1023 = vshrl.u32 %v1022, 7
        %v1024 = vsub.s32 %v860, %v1023
        %v1025 = vrot.slane %v799, %v1024
        %v1026 = vsel %vm865, %v1025, %v1021
        %v1027 = vlaneseq
        %v1028 = vshrl.u32 %v1027, 7
        %v1029 = vsub.s32 %v867, %v1028
        %v1030 = vrot.slane %v800, %v1029
        %v1031 = vsel %vm872, %v1030, %v1026
        %v1032 = vlaneseq
        %v1033 = vshrl.u32 %v1032, 7
        %v1034 = vsub.s32 %v874, %v1033
        %v1035 = vrot.slane %v801, %v1034
        %v1036 = vsel %vm879, %v1035, %v1031
        %v1037 = vlaneseq
        %v1038 = vshrl.u32 %v1037, 7
        %v1039 = vsub.s32 %v827, %v1038
        %v1040 = vrot.slane %v802, %v1039
        %v1041 = vlaneseq
        %v1042 = vshrl.u32 %v1041, 7
        %v1043 = vsub.s32 %v832, %v1042
        %v1044 = vrot.slane %v803, %v1043
        %v1045 = vsel %vm837, %v1044, %v1040
        %v1046 = vlaneseq
        %v1047 = vshrl.u32 %v1046, 7
        %v1048 = vsub.s32 %v839, %v1047
        %v1049 = vrot.slane %v804, %v1048
        %v1050 = vsel %vm844, %v1049, %v1045
        %v1051 = vlaneseq
        %v1052 = vshrl.u32 %v1051, 7
        %v1053 = vsub.s32 %v846, %v1052
        %v1054 = vrot.slane %v805, %v1053
        %v1055 = vsel %vm851, %v1054, %v1050
        %v1056 = vlaneseq
        %v1057 = vshrl.u32 %v1056, 7
        %v1058 = vsub.s32 %v853, %v1057
        %v1059 = vrot.slane %v806, %v1058
        %v1060 = vsel %vm858, %v1059, %v1055
        %v1061 = vlaneseq
        %v1062 = vshrl.u32 %v1061, 7
        %v1063 = vsub.s32 %v860, %v1062
        %v1064 = vrot.slane %v807, %v1063
        %v1065 = vsel %vm865, %v1064, %v1060
        %v1066 = vlaneseq
        %v1067 = vshrl.u32 %v1066, 7
        %v1068 = vsub.s32 %v867, %v1067
        %v1069 = vrot.slane %v808, %v1068
        %v1070 = vsel %vm872, %v1069, %v1065
        %v1071 = vlaneseq
        %v1072 = vshrl.u32 %v1071, 7
        %v1073 = vsub.s32 %v874, %v1072
        %v1074 = vrot.slane %v809, %v1073
        %v1075 = vsel %vm879, %v1074, %v1070
        %v1076 = vlaneseq
        %v1077 = vshrl.u32 %v1076, 7
        %v1078 = vsub.s32 %v827, %v1077
        %v1079 = vrot.slane %v810, %v1078
        %v1080 = vlaneseq
        %v1081 = vshrl.u32 %v1080, 7
        %v1082 = vsub.s32 %v832, %v1081
        %v1083 = vrot.slane %v811, %v1082
        %v1084 = vsel %vm837, %v1083, %v1079
        %v1085 = vlaneseq
        %v1086 = vshrl.u32 %v1085, 7
        %v1087 = vsub.s32 %v839, %v1086
        %v1088 = vrot.slane %v812, %v1087
        %v1089 = vsel %vm844, %v1088, %v1084
        %v1090 = vlaneseq
        %v1091 = vshrl.u32 %v1090, 7
        %v1092 = vsub.s32 %v846, %v1091
        %v1093 = vrot.slane %v813, %v1092
        %v1094 = vsel %vm851, %v1093, %v1089
        %v1095 = vlaneseq
        %v1096 = vshrl.u32 %v1095, 7
        %v1097 = vsub.s32 %v853, %v1096
        %v1098 = vrot.slane %v814, %v1097
        %v1099 = vsel %vm858, %v1098, %v1094
        %v1100 = vlaneseq
        %v1101 = vshrl.u32 %v1100, 7
        %v1102 = vsub.s32 %v860, %v1101
        %v1103 = vrot.slane %v815, %v1102
        %v1104 = vsel %vm865, %v1103, %v1099
        %v1105 = vlaneseq
        %v1106 = vshrl.u32 %v1105, 7
        %v1107 = vsub.s32 %v867, %v1106
        %v1108 = vrot.slane %v816, %v1107
        %v1109 = vsel %vm872, %v1108, %v1104
        %v1110 = vlaneseq
        %v1111 = vshrl.u32 %v1110, 7
        %v1112 = vsub.s32 %v874, %v1111
        %v1113 = vrot.slane %v817, %v1112
        %v1114 = vsel %vm879, %v1113, %v1109
        %v1115 = vlaneseq
        %v1116 = vshrl.u32 %v1115, 7
        %v1117 = vsub.s32 %v827, %v1116
        %v1118 = vrot.slane %v818, %v1117
        %v1119 = vlaneseq
        %v1120 = vshrl.u32 %v1119, 7
        %v1121 = vsub.s32 %v832, %v1120
        %v1122 = vrot.slane %v819, %v1121
        %v1123 = vsel %vm837, %v1122, %v1118
        %v1124 = vlaneseq
        %v1125 = vshrl.u32 %v1124, 7
        %v1126 = vsub.s32 %v839, %v1125
        %v1127 = vrot.slane %v820, %v1126
        %v1128 = vsel %vm844, %v1127, %v1123
        %v1129 = vlaneseq
        %v1130 = vshrl.u32 %v1129, 7
        %v1131 = vsub.s32 %v846, %v1130
        %v1132 = vrot.slane %v821, %v1131
        %v1133 = vsel %vm851, %v1132, %v1128
        %v1134 = vlaneseq
        %v1135 = vshrl.u32 %v1134, 7
        %v1136 = vsub.s32 %v853, %v1135
        %v1137 = vrot.slane %v822, %v1136
        %v1138 = vsel %vm858, %v1137, %v1133
        %v1139 = vlaneseq
        %v1140 = vshrl.u32 %v1139, 7
        %v1141 = vsub.s32 %v860, %v1140
        %v1142 = vrot.slane %v823, %v1141
        %v1143 = vsel %vm865, %v1142, %v1138
        %v1144 = vlaneseq
        %v1145 = vshrl.u32 %v1144, 7
        %v1146 = vsub.s32 %v867, %v1145
        %v1147 = vrot.slane %v824, %v1146
        %v1148 = vsel %vm872, %v1147, %v1143
        %v1149 = vlaneseq
        %v1150 = vshrl.u32 %v1149, 7
        %v1151 = vsub.s32 %v874, %v1150
        %v1152 = vrot.slane %v825, %v1151
        %v1153 = vsel %vm879, %v1152, %v1148
        %vm1154 = vcmask 1041409
        %v1155 = vsel %vm1154, %v919, %v880
        %vm1156 = vcmask 1042434
        %v1157 = vsel %vm1156, %v958, %v1155
        %vm1158 = vcmask 1043459
        %v1159 = vsel %vm1158, %v997, %v1157
        %vm1160 = vcmask 1044484
        %v1161 = vsel %vm1160, %v1036, %v1159
        %vm1162 = vcmask 1045509
        %v1163 = vsel %vm1162, %v1075, %v1161
        %vm1164 = vcmask 1046534
        %v1165 = vsel %vm1164, %v1114, %v1163
        %vm1166 = vcmask 1047559
        %v1167 = vsel %vm1166, %v1153, %v1165
        %v1168 = vpack.c.b16 %v1167, %v1167
        %v1177 = vunpack.c.l.b16 %v722
        %v1178 = vunpack.c.l.b16 %v723
        %v1179 = vunpack.c.l.b16 %v724
        %v1180 = vunpack.c.l.b16 %v725
        %v1181 = vunpack.c.l.b16 %v726
        %v1182 = vunpack.c.l.b16 %v727
        %v1183 = vunpack.c.l.b16 %v728
        %v1184 = vunpack.c.l.b16 %v729
        %v1185 = vpack.c.b16 %v1178, %v1177
        %v1186 = vpack.c.b16 %v1180, %v1179
        %v1187 = vpack.c.b16 %v1182, %v1181
        %v1188 = vpack.c.b16 %v1184, %v1183
        %vm1193 = vcmask 523264
        %v1195 = vsel %vm1193, %v1168, 0
        %1197 = vmatprep.subr.bf16.mxu0 0
        %1198 = vmatpush1.bf16.msra.mxu0 %v1185
        %1199 = vmatprep.subr.bf16.mxu0 0
        %1200 = vmatpush1.bf16.msra.mxu0 %v1186
        %1201 = vmatprep.subr.bf16.mxu0 0
        %1202 = vmatpush1.bf16.msra.mxu0 %v1187
        %1203 = vmatprep.subr.bf16.mxu0 0
        %1204 = vmatpush1.bf16.msra.mxu0 %v1188
        %1205 = vmatprep.subr.bf16.mxu0 0
        %1206 = vmatpush1.bf16.msra.mxu0 0
        %1207 = vmatprep.subr.bf16.mxu0 0
        %1208 = vmatpush1.bf16.msra.mxu0 0
        %1209 = vmatprep.subr.bf16.mxu0 0
        %1210 = vmatpush1.bf16.msra.mxu0 0
        %1211 = vmatprep.subr.bf16.mxu0 0
        %1212 = vmatpush1.bf16.msra.mxu0 0
        %1213 = vmatprep.subr.bf16.mxu0 0
        %1214 = vmatpush1.bf16.msra.mxu0 0
        %1215 = vmatprep.subr.bf16.mxu0 0
        %1216 = vmatpush1.bf16.msra.mxu0 0
        %1217 = vmatprep.subr.bf16.mxu0 0
        %1218 = vmatpush1.bf16.msra.mxu0 0
        %1219 = vmatprep.subr.bf16.mxu0 0
        %1220 = vmatpush1.bf16.msra.mxu0 0
        %1221 = vmatprep.subr.bf16.mxu0 0
        %1222 = vmatpush1.bf16.msra.mxu0 0
        %1223 = vmatprep.subr.bf16.mxu0 0
        %1224 = vmatpush1.bf16.msra.mxu0 0
        %1225 = vmatprep.subr.bf16.mxu0 0
        %1226 = vmatpush1.bf16.msra.mxu0 0
        %1227 = vmatprep.subr.bf16.mxu0 0
        %1228 = vmatpush1.bf16.msra.mxu0 0
        %1229 = vmatprep.mubr.bf16.mxu0 0
        %1230 = vmatmul.mubr.bf16.gmra.mrb[0].mxu0 %v1195
        %v1231 = vpop.f32.mrb[0].mxu0
        %v1232 = vadd.f32 0.0, %v1231
        %v1233 = vpop.f32.mrb[0].mxu0
        %v1234 = vpop.f32.mrb[0].mxu0
        %v1235 = vpop.f32.mrb[0].mxu0
        %1236 = vdwg.mxu0
        %v1237 = vadd.f32 %v689, %v1232
        %1238 = vst [vmem:[#allocation2] sm:$0xff] %v1237
        %p1239 = scmp.eq.s32.totalorder %s28, 1
        // Predicated region
        $region57: #{tpu_custom_call.1} parent=39 // pred_check
          %p1240 = pneg %p1239
        $region58: #{tpu_custom_call.1} parent=39 // pred_check_branch
          %1242 = sbr.rel (%p1240) target = $region60
        $region59: #{tpu_custom_call.1} parent=39 // pred_region
          %v1243 = vld [vmem:[#allocation2] sm:$0xff]
          %v1244 = vld [vmem:[%s305] sm:$0xff]
          %v1245 = vmax.f32 %v1244, 1.0
          %1247 = vset.pattern.permute.xlu0 0
          %1248 = vperm.xlu0 %1247, %v1245
          %v1249 = vpop.permute.xlu0 %1248
          %v1251 = vrcp.pop %v1249
          %v1252 = vmul.f32 %v1243, %v1251
          %v1253 = vld [vmem:[#allocation8] sm:$0xff]
          %v1254 = vld [vmem:[#allocation8 + $0x8] sm:$0xff]
          %v1255 = vld [vmem:[#allocation8 + $0x10] sm:$0xff]
          %v1256 = vld [vmem:[#allocation8 + $0x18] sm:$0xff]
          %v1257 = vld [vmem:[#allocation8 + $0x20] sm:$0xff]
          %v1258 = vld [vmem:[#allocation8 + $0x28] sm:$0xff]
          %v1259 = vld [vmem:[#allocation8 + $0x30] sm:$0xff]
          %v1260 = vld [vmem:[#allocation8 + $0x38] sm:$0xff]
          %v1261 = vld [vmem:[#allocation8 + $0x40] sm:$0xff]
          %v1262 = vld [vmem:[#allocation8 + $0x48] sm:$0xff]
          %v1263 = vld [vmem:[#allocation8 + $0x50] sm:$0xff]
          %v1264 = vld [vmem:[#allocation8 + $0x58] sm:$0xff]
          %v1265 = vld [vmem:[#allocation8 + $0x60] sm:$0xff]
          %v1266 = vld [vmem:[#allocation8 + $0x68] sm:$0xff]
          %v1267 = vld [vmem:[#allocation8 + $0x70] sm:$0xff]
          %v1268 = vld [vmem:[#allocation8 + $0x78] sm:$0xff]
          %v1269 = vld [vmem:[%s4] sm:$0x1]
          %v1271 = vlaneseq
          %v1272 = vshrl.u32 %v1271, 7
          %v1273 = vsub.s32 0, %v1272
          %v1274 = vrot.slane %v1269, %v1273
          %1276 = vmatprep.subr.mxu0 0.0
          %1277 = vmatpush1.msra.mxu0 %v1253
          %1278 = vmatprep.subr.mxu0 0.0
          %1279 = vmatpush1.msra.mxu0 %v1254
          %1280 = vmatprep.subr.mxu0 0.0
          %1281 = vmatpush1.msra.mxu0 %v1255
          %1282 = vmatprep.subr.mxu0 0.0
          %1283 = vmatpush1.msra.mxu0 %v1256
          %1284 = vmatprep.subr.mxu0 0.0
          %1285 = vmatpush1.msra.mxu0 %v1257
          %1286 = vmatprep.subr.mxu0 0.0
          %1287 = vmatpush1.msra.mxu0 %v1258
          %1288 = vmatprep.subr.mxu0 0.0
          %1289 = vmatpush1.msra.mxu0 %v1259
          %1290 = vmatprep.subr.mxu0 0.0
          %1291 = vmatpush1.msra.mxu0 %v1260
          %1292 = vmatprep.subr.mxu0 0.0
          %1293 = vmatpush1.msra.mxu0 %v1261
          %1294 = vmatprep.subr.mxu0 0.0
          %1295 = vmatpush1.msra.mxu0 %v1262
          %1296 = vmatprep.subr.mxu0 0.0
          %1297 = vmatpush1.msra.mxu0 %v1263
          %1298 = vmatprep.subr.mxu0 0.0
          %1299 = vmatpush1.msra.mxu0 %v1264
          %1300 = vmatprep.subr.mxu0 0.0
          %1301 = vmatpush1.msra.mxu0 %v1265
          %1302 = vmatprep.subr.mxu0 0.0
          %1303 = vmatpush1.msra.mxu0 %v1266
          %1304 = vmatprep.subr.mxu0 0.0
          %1305 = vmatpush1.msra.mxu0 %v1267
          %1306 = vmatprep.subr.mxu0 0.0
          %1307 = vmatpush1.msra.mxu0 %v1268
          %1308 = vmatprep.subr.mxu0 0.0
          %1309 = vmatpush1.msra.mxu0 0.0
          %1310 = vmatprep.subr.mxu0 0.0
          %1311 = vmatpush1.msra.mxu0 0.0
          %1312 = vmatprep.subr.mxu0 0.0
          %1313 = vmatpush1.msra.mxu0 0.0
          %1314 = vmatprep.subr.mxu0 0.0
          %1315 = vmatpush1.msra.mxu0 0.0
          %1316 = vmatprep.subr.mxu0 0.0
          %1317 = vmatpush1.msra.mxu0 0.0
          %1318 = vmatprep.subr.mxu0 0.0
          %1319 = vmatpush1.msra.mxu0 0.0
          %1320 = vmatprep.subr.mxu0 0.0
          %1321 = vmatpush1.msra.mxu0 0.0
          %1322 = vmatprep.subr.mxu0 0.0
          %1323 = vmatpush1.msra.mxu0 0.0
          %1324 = vmatprep.subr.mxu0 0.0
          %1325 = vmatpush1.msra.mxu0 0.0
          %1326 = vmatprep.subr.mxu0 0.0
          %1327 = vmatpush1.msra.mxu0 0.0
          %1328 = vmatprep.subr.mxu0 0.0
          %1329 = vmatpush1.msra.mxu0 0.0
          %1330 = vmatprep.subr.mxu0 0.0
          %1331 = vmatpush1.msra.mxu0 0.0
          %1332 = vmatprep.subr.mxu0 0.0
          %1333 = vmatpush1.msra.mxu0 0.0
          %1334 = vmatprep.subr.mxu0 0.0
          %1335 = vmatpush1.msra.mxu0 0.0
          %1336 = vmatprep.subr.mxu0 0.0
          %1337 = vmatpush1.msra.mxu0 0.0
          %1338 = vmatprep.subr.mxu0 0.0
          %1339 = vmatpush1.msra.mxu0 0.0
          %1340 = vmatprep.mubr.f32.mxu0 0.0
          %1341 = vmatmul.mubr.f32.gmra.mrb[0].mxu0 %v1252
          %v1342 = vpop.f32.mrb[0].mxu0
          %v1343 = vadd.f32 %v1274, %v1342
          %v1344 = vpop.f32.mrb[0].mxu0
          %1345 = vdwg.mxu0
          %v1346 = vtanh.pop %v1343
          %1347 = vst [vmem:[%s300] sm:$0xff] %v1346
        $region60: #{tpu_custom_call.1} parent=39 // pred_fallthru
          _
        %s1348 = sand.u32 %s160, 1
        %s1349 = scalar_lea.sflag [#allocation5], %s1348
        %s1350 = sand.u32 %s160, 1
        %s1351 = smul.addr %s1350, 8
        %s1352 = scalar_lea.vmem [#allocation9], %s1351
        // Predicated region
        $region61: #{tpu_custom_call.1} parent=39 // pred_check
          %p1353 = pneg %p170
        $region62: #{tpu_custom_call.1} parent=39 // pred_check_branch
          %1355 = sbr.rel (%p1353) target = $region64
        $region63: #{tpu_custom_call.1} parent=39 // pred_region
          %s1357 = ssub.s32 128, 128
          %1358 = vsyncadd %s1349, %s1357
          %s1359 = smul.addr %s27, 128
          %s1360 = scalar_lea.hbm %s5, %s1359
          %s1362 = sshll.u32 %s1352, 4
          %s1363 = int_to_ptr.vmem [resolvable:$true] %s1362
          %1365 = dma.vmem_to_hbm [thread:$0]  %s1363, 128, %s1360, %s1349
        $region64: #{tpu_custom_call.1} parent=39 // pred_fallthru
          _
      $region40: #{tpu_custom_call.1} parent=5 // pred_fallthru
        _
      %p1366 = scmp.le.s32.totalorder 2, %s18
      // Predicated region
      $region65: #{tpu_custom_call.1} parent=5 // pred_check
        %p1367 = pneg %p1366
      $region66: #{tpu_custom_call.1} parent=5 // pred_check_branch
        %1369 = sbr.rel (%p1367) target = $region68
      $region67: #{tpu_custom_call.1} parent=5 // pred_region
        %s1370 = ssub.s32 %s18, 2
        // Predicated region
        $region69: #{tpu_custom_call.1} parent=67 // pred_check
          %p1371 = pneg %p176
        $region70: #{tpu_custom_call.1} parent=67 // pred_check_branch
          %1373 = sbr.rel (%p1371) target = $region72
        $region71: #{tpu_custom_call.1} parent=67 // pred_region
          %s1374 = sand.u32 %s161, 1
          %s1375 = scalar_lea.sflag [#allocation5], %s1374
          %s1376 = sand.u32 %s161, 1
          %s1377 = smul.addr %s1376, 8
          %s1378 = scalar_lea.vmem [#allocation9], %s1377
          %1379 = dma.done %s1375, 128
        $region72: #{tpu_custom_call.1} parent=67 // pred_fallthru
          _
      $region68: #{tpu_custom_call.1} parent=5 // pred_fallthru
        _
    $region6: #{tpu_custom_call.1} parent=1 // loop_footer
      %s22 = sadd.s32 1, %s18
    $region7: #{tpu_custom_call.1} parent=1 // loop_footer_branch
      %17 = sbr.rel target = $region3
    $region8: #{tpu_custom_call.1} parent=1 // loop_exit
      _
    %1380 = vsyncpa [#allocation4], 1
    %s1381 = scalar_lea.sflag [#allocation4], 1
    %1382 = vsyncpa %s1381, 1
    %1383 = vsyncpa [#allocation7], 1
    %1384 = vsyncpa [#allocation5], 1
    %s1385 = scalar_lea.sflag [#allocation5], 1
    %1386 = vsyncpa %s1385, 1

</llo_original>
